<compile_context>
chip_gen: v7x
topology: tpu7x:2x2x1
jax: 0.10.0
libtpu: 0.0.40
codegen_flags: <defaults>
</compile_context>

<pallas_src>
import functools
import math

import jax
import jax.numpy as jnp
from jax import lax
from jax.experimental import pallas as pl
from jax.experimental.pallas import tpu as pltpu

NEG_INF = -1e9


# ----------------------------- Pallas kernel ------------------------------ #

def _encoder_layer_kernel(x_ref, pe_ref, mask_ref,
                          wqkv_ref, bqkv_ref, wo_ref, bo_ref,
                          g1_ref, be1_ref, g2_ref, be2_ref,
                          w1_ref, b1_ref, w2_ref, b2_ref,
                          o_ref, x_sc, ctx_sc, *, n_heads, seq, emb_scale):
    """One encoder layer for one batch tile; activation carried in x_sc across layers."""
    l = pl.program_id(1)
    n_layers = pl.num_programs(1)
    rows, dim = x_sc.shape
    hd = dim // n_heads
    cdt = jnp.bfloat16                                   # matmul operand dtype

    # --- first layer: embedding scale + positional add into the resident slab ----- #
    @pl.when(l == 0)
    def _():
        x_sc[...] = x_ref[0].astype(jnp.float32) * emb_scale + pe_ref[...]

    x = x_sc[...]                                        # (rows, dim) f32

    # --- attention bias: key padding (+ block-diagonal batch isolation if packed) -- #
    key_bias = mask_ref[0]                               # (1, rows): 0 / -1e9 per key
    if rows != seq:                                      # several batch rows packed
        q_bid = lax.broadcasted_iota(jnp.int32, (rows, 1), 0) // seq
        k_bid = lax.broadcasted_iota(jnp.int32, (1, rows), 1) // seq
        bias = jnp.where(q_bid == k_bid, 0.0, NEG_INF).astype(jnp.float32) + key_bias
    else:
        bias = key_bias                                  # broadcasts over query rows

    # --- fused QKV projection (1/sqrt(hd) already folded into Wq/bq) -------------- #
    qkv = jnp.dot(x.astype(cdt), wqkv_ref[0],
                  preferred_element_type=jnp.float32) + bqkv_ref[0]    # (rows, 3*dim)
    qkv_b = qkv.astype(cdt)                              # hoisted cast

    # --- per-head attention; contexts concatenated into ctx_sc -------------------- #
    for h in range(n_heads):
        qh = qkv_b[:, h * hd:(h + 1) * hd]
        kh = qkv_b[:, dim + h * hd:dim + (h + 1) * hd]
        vh = qkv_b[:, 2 * dim + h * hd:2 * dim + (h + 1) * hd]
        s = lax.dot_general(qh, kh, (((1,), (1,)), ((), ())),
                            preferred_element_type=jnp.float32)        # (rows, rows)
        s = s + bias
        m = jnp.max(s, axis=-1, keepdims=True)
        p = jnp.exp(s - m)
        p = p * pl.reciprocal(jnp.sum(p, axis=-1, keepdims=True), approx=True)
        ctx = jnp.dot(p.astype(cdt), vh, preferred_element_type=jnp.float32)
        ctx_sc[:, h * hd:(h + 1) * hd] = ctx.astype(cdt)

    # --- single K=dim output projection ------------------------------------------- #
    attn = jnp.dot(ctx_sc[...], wo_ref[0],
                   preferred_element_type=jnp.float32) + bo_ref[0]

    # --- residual + LayerNorm 1 (post-norm) ---------------------------------------- #
    y = x + attn
    mu = jnp.mean(y, axis=-1, keepdims=True)
    var = jnp.mean(jnp.square(y - mu), axis=-1, keepdims=True)
    y = (y - mu) * lax.rsqrt(var + 1e-5) * g1_ref[0] + be1_ref[0]

    # --- feed-forward (ReLU: PyTorch TransformerEncoderLayer default) -------------- #
    # TODO(synk): if config.symbol_encoder uses GELU, swap the activation here.
    h1 = jnp.dot(y.astype(cdt), w1_ref[0],
                 preferred_element_type=jnp.float32) + b1_ref[0]
    h1 = jnp.maximum(h1, 0.0)
    h2 = jnp.dot(h1.astype(cdt), w2_ref[0],
                 preferred_element_type=jnp.float32) + b2_ref[0]

    # --- residual + LayerNorm 2 ----------------------------------------------------- #
    z = y + h2
    mu = jnp.mean(z, axis=-1, keepdims=True)
    var = jnp.mean(jnp.square(z - mu), axis=-1, keepdims=True)
    xn = (z - mu) * lax.rsqrt(var + 1e-5) * g2_ref[0] + be2_ref[0]

    x_sc[...] = xn

    @pl.when(l == n_layers - 1)
    def _():
        o_ref[0] = xn


# ------------------------------ wrapper ------------------------------------ #

def _pick_b_tile(bs, seq, target_rows=256, max_pack_seq=32):
    """How many batch elements to pack into one attention slab.

    Row-packing is only worth it for short sequences (attention work scales as
    (b_tile*seq)^2); prefer a batch tiling whose grid size is even (v7x has 2 TCs)."""
    if seq > max_pack_seq:
        return 1
    divs = [d for d in range(1, bs + 1) if bs % d == 0 and d * seq <= target_rows]
    if not divs:
        return 1
    even = [d for d in divs if (bs // d) % 2 == 0]
    return max(even) if even else max(divs)


def _vmem_limit_bytes(rows, dim, ffn, n_layers):
    """2x one layer of bf16 weights (double buffering) + f32 activation working set."""
    per_layer_w = 2 * (dim * 3 * dim + dim * dim + 2 * dim * ffn)       # bf16 bytes
    act = 4 * (6 * rows * dim + rows * 3 * dim + rows * ffn + 2 * rows * rows)
    est = 2 * per_layer_w + act + (8 << 20)
    return int(min(max(est, 32 << 20), 60 << 20))


def symbol_encoder_stack(x_emb, mask_bias, pe_rows, packed, *, n_heads, seq):
    """x_emb: (nt, rows, dim) bf16, mask_bias: (nt, 1, rows) f32, pe_rows: (rows, dim) f32."""
    nt, rows, dim = x_emb.shape
    n_layers = packed["wqkv"].shape[0]
    ffn = packed["w1"].shape[2]

    def const_spec(shape):
        nd = len(shape)
        return pl.BlockSpec(shape, lambda b, l, _nd=nd: (0,) * _nd)

    def batch_spec(shape):
        return pl.BlockSpec(shape, lambda b, l: (b, 0, 0))

    def layer_spec(shape):
        return pl.BlockSpec(shape, lambda b, l: (l, 0, 0))

    in_specs = [
        batch_spec((1, rows, dim)),                      # embedded tokens (bf16)
        const_spec((rows, dim)),                         # positional embedding
        batch_spec((1, 1, rows)),                        # key-padding bias
        layer_spec((1, dim, 3 * dim)), layer_spec((1, 1, 3 * dim)),     # wqkv, bqkv
        layer_spec((1, dim, dim)), layer_spec((1, 1, dim)),             # wo, bo
        layer_spec((1, 1, dim)), layer_spec((1, 1, dim)),               # ln1 g, b
        layer_spec((1, 1, dim)), layer_spec((1, 1, dim)),               # ln2 g, b
        layer_spec((1, dim, ffn)), layer_spec((1, 1, ffn)),             # w1, b1
        layer_spec((1, ffn, dim)), layer_spec((1, 1, dim)),             # w2, b2
    ]

    kernel = functools.partial(_encoder_layer_kernel, n_heads=n_heads, seq=seq,
                               emb_scale=float(math.sqrt(dim)))

    return pl.pallas_call(
        kernel,
        out_shape=jax.ShapeDtypeStruct((nt, rows, dim), jnp.float32),
        grid_spec=pltpu.PrefetchScalarGridSpec(
            num_scalar_prefetch=0,
            grid=(nt, n_layers),                          # layers stream as inner axis
            in_specs=in_specs,
            out_specs=batch_spec((1, rows, dim)),
            scratch_shapes=[
                pltpu.VMEM((rows, dim), jnp.float32),     # resident activation slab
                pltpu.VMEM((rows, dim), jnp.bfloat16),    # concatenated head contexts
            ],
        ),
        compiler_params=pltpu.CompilerParams(
            dimension_semantics=("parallel", "arbitrary"),
            vmem_limit_bytes=_vmem_limit_bytes(rows, dim, ffn, n_layers),
        ),
    )(x_emb, pe_rows, mask_bias,
      packed["wqkv"], packed["bqkv"], packed["wo"], packed["bo"],
      packed["ln1_g"], packed["ln1_b"], packed["ln2_g"], packed["ln2_b"],
      packed["w1"], packed["b1"], packed["w2"], packed["b2"])


# ------------------------------- glue ------------------------------------- #

def sinusoidal_pos_emb(max_len, dim):
    pos = jnp.arange(max_len, dtype=jnp.float32)[:, None]
    i = jnp.arange(dim // 2, dtype=jnp.float32)[None, :]
    angle = pos / jnp.power(10000.0, 2.0 * i / dim)
    pe = jnp.zeros((max_len, dim), jnp.float32)
    pe = pe.at[:, 0::2].set(jnp.sin(angle))
    pe = pe.at[:, 1::2].set(jnp.cos(angle))
    return pe


def init_params(key, *, vocab, dim, ffn, n_layers):
    ks = jax.random.split(key, 1 + n_layers)
    params = {"embed": 0.02 * jax.random.normal(ks[0], (vocab, dim), jnp.float32),
              "layers": []}
    for l in range(n_layers):
        lk = jax.random.split(ks[1 + l], 6)
        s = 0.02
        params["layers"].append({
            "wq": s * jax.random.normal(lk[0], (dim, dim), jnp.float32),
            "bq": jnp.zeros((1, dim), jnp.float32),
            "wk": s * jax.random.normal(lk[1], (dim, dim), jnp.float32),
            "bk": jnp.zeros((1, dim), jnp.float32),
            "wv": s * jax.random.normal(lk[2], (dim, dim), jnp.float32),
            "bv": jnp.zeros((1, dim), jnp.float32),
            "wo": s * jax.random.normal(lk[3], (dim, dim), jnp.float32),
            "bo": jnp.zeros((1, dim), jnp.float32),
            "ln1_g": jnp.ones((1, dim), jnp.float32),
            "ln1_b": jnp.zeros((1, dim), jnp.float32),
            "ln2_g": jnp.ones((1, dim), jnp.float32),
            "ln2_b": jnp.zeros((1, dim), jnp.float32),
            "w1": s * jax.random.normal(lk[4], (dim, ffn), jnp.float32),
            "b1": jnp.zeros((1, ffn), jnp.float32),
            "w2": s * jax.random.normal(lk[5], (ffn, dim), jnp.float32),
            "b2": jnp.zeros((1, dim), jnp.float32),
        })
    return params


def pack_params(params, *, n_heads):
    """Stack per-layer weights into (L, 1/..., ...) arrays; fuse QKV and fold the
    1/sqrt(hd) softmax scale into Wq/bq; matmul weight matrices stored bf16."""
    layers = params["layers"]
    dim = params["embed"].shape[1]
    scale = 1.0 / math.sqrt(dim // n_heads)
    st = lambda k: jnp.stack([lp[k] for lp in layers], axis=0)
    wqkv = jnp.stack([jnp.concatenate([lp["wq"] * scale, lp["wk"], lp["wv"]], axis=1)
                      for lp in layers], axis=0).astype(jnp.bfloat16)
    bqkv = jnp.stack([jnp.concatenate([lp["bq"] * scale, lp["bk"], lp["bv"]], axis=1)
                      for lp in layers], axis=0)
    return {
        "wqkv": wqkv, "bqkv": bqkv,
        "wo": st("wo").astype(jnp.bfloat16), "bo": st("bo"),
        "ln1_g": st("ln1_g"), "ln1_b": st("ln1_b"),
        "ln2_g": st("ln2_g"), "ln2_b": st("ln2_b"),
        "w1": st("w1").astype(jnp.bfloat16), "b1": st("b1"),
        "w2": st("w2").astype(jnp.bfloat16), "b2": st("b2"),
    }


def prose_symbol_encoder_fwd(params, symbol_input, symbol_padding_mask=None, *, n_heads):
    """Mirrors PROSE_1DPDE_freeze_symbol_encoder.fwd.

    symbol_input:        (bs, symbol_len) int32
    symbol_padding_mask: (bs, symbol_len) bool, True for padded elements (or None)
    returns {"symbol_encoded": (bs, symbol_len, dim) f32}
    """
    bs, seq = symbol_input.shape
    dim = params["embed"].shape[1]

    b_tile = _pick_b_tile(bs, seq)                 # batch elements packed per slab
    nt = bs // b_tile
    rows = b_tile * seq

    # embedding gather stays in XLA glue; scale + positional add are fused in-kernel
    x = params["embed"][symbol_input].astype(jnp.bfloat16).reshape(nt, rows, dim)
    pe_rows = jnp.tile(sinusoidal_pos_emb(seq, dim), (b_tile, 1))        # (rows, dim)

    if symbol_padding_mask is None:
        mask_bias = jnp.zeros((nt, 1, rows), jnp.float32)
    else:
        mask_bias = jnp.where(symbol_padding_mask, NEG_INF, 0.0).astype(jnp.float32)
        mask_bias = mask_bias.reshape(nt, 1, rows)

    packed = pack_params(params, n_heads=n_heads)
    out = symbol_encoder_stack(x, mask_bias, pe_rows, packed, n_heads=n_heads, seq=seq)
    return {"symbol_encoded": out.reshape(bs, seq, dim)}


# ------------------------------- main -------------------------------------- #

if __name__ == "__main__":
    # TODO(synk): exact TransformerSymbolEncoder hyper-params come from
    # config.symbol_encoder / symbol_env.equation_id2word; synthetic small values here.
    VOCAB, DIM, HEADS, FFN, LAYERS = 50, 32, 4, 64, 2
    BS, SEQ = 2, 8

    key = jax.random.PRNGKey(0)
    kp, kt = jax.random.split(key)
    params = init_params(kp, vocab=VOCAB, dim=DIM, ffn=FFN, n_layers=LAYERS)

    symbol_input = jax.random.randint(kt, (BS, SEQ), 0, VOCAB, dtype=jnp.int32)
    # True for padded elements: pad the last two tokens of batch element 1
    symbol_padding_mask = jnp.zeros((BS, SEQ), jnp.bool_).at[1, -2:].set(True)

    out = prose_symbol_encoder_fwd(params, symbol_input, symbol_padding_mask, n_heads=HEADS)
    enc = jax.block_until_ready(out["symbol_encoded"])

    assert enc.shape == (BS, SEQ, DIM), enc.shape
    assert jnp.all(jnp.isfinite(enc))
    print("KERNEL_OK")
</pallas_src>

<mosaic_0001>
module attributes {stable_mosaic.version = 11 : i64} {
  func.func @_encoder_layer_kernel(%arg0: i32, %arg1: i32, %arg2: memref<1x8x32xbf16, #tpu.memory_space<vmem>>, %arg3: memref<8x32xf32, #tpu.memory_space<vmem>>, %arg4: memref<1x1x8xf32, #tpu.memory_space<vmem>>, %arg5: memref<1x32x96xbf16, #tpu.memory_space<vmem>>, %arg6: memref<1x1x96xf32, #tpu.memory_space<vmem>>, %arg7: memref<1x32x32xbf16, #tpu.memory_space<vmem>>, %arg8: memref<1x1x32xf32, #tpu.memory_space<vmem>>, %arg9: memref<1x1x32xf32, #tpu.memory_space<vmem>>, %arg10: memref<1x1x32xf32, #tpu.memory_space<vmem>>, %arg11: memref<1x1x32xf32, #tpu.memory_space<vmem>>, %arg12: memref<1x1x32xf32, #tpu.memory_space<vmem>>, %arg13: memref<1x32x64xbf16, #tpu.memory_space<vmem>>, %arg14: memref<1x1x64xf32, #tpu.memory_space<vmem>>, %arg15: memref<1x64x32xbf16, #tpu.memory_space<vmem>>, %arg16: memref<1x1x32xf32, #tpu.memory_space<vmem>>, %arg17: memref<1x8x32xf32, #tpu.memory_space<vmem>>, %arg18: memref<8x32xf32, #tpu.memory_space<vmem>>, %arg19: memref<8x32xbf16, #tpu.memory_space<vmem>>) attributes {dimension_semantics = [#tpu.dimension_semantics<parallel>, #tpu.dimension_semantics<arbitrary>], iteration_bounds = array<i64: 2, 2>, scalar_prefetch = 0 : i64, scratch_operands = 2 : i64, tpu.core_type = #tpu.core_type<tc>, window_params = [{transform_indices = @transform_0, window_bounds = array<i64: 1, 8, 32>}, {pipeline_mode = #tpu.pipeline_mode<synchronous>, transform_indices = @transform_1, window_bounds = array<i64: 8, 32>}, {transform_indices = @transform_2, window_bounds = array<i64: 1, 1, 8>}, {transform_indices = @transform_3, window_bounds = array<i64: 1, 32, 96>}, {transform_indices = @transform_4, window_bounds = array<i64: 1, 1, 96>}, {transform_indices = @transform_5, window_bounds = array<i64: 1, 32, 32>}, {transform_indices = @transform_6, window_bounds = array<i64: 1, 1, 32>}, {transform_indices = @transform_7, window_bounds = array<i64: 1, 1, 32>}, {transform_indices = @transform_8, window_bounds = array<i64: 1, 1, 32>}, {transform_indices = @transform_9, window_bounds = array<i64: 1, 1, 32>}, {transform_indices = @transform_10, window_bounds = array<i64: 1, 1, 32>}, {transform_indices = @transform_11, window_bounds = array<i64: 1, 32, 64>}, {transform_indices = @transform_12, window_bounds = array<i64: 1, 1, 64>}, {transform_indices = @transform_13, window_bounds = array<i64: 1, 64, 32>}, {transform_indices = @transform_14, window_bounds = array<i64: 1, 1, 32>}, {transform_indices = @transform_15, window_bounds = array<i64: 1, 8, 32>}]} {
    %c0_i32 = arith.constant 0 : i32
    %0 = arith.cmpi eq, %arg1, %c0_i32 : i32
    %1 = arith.extui %0 : i1 to i32
    %c0_i32_0 = arith.constant 0 : i32
    %2 = arith.cmpi ne, %1, %c0_i32_0 : i32
    scf.if %2 {
      %c0_81 = arith.constant 0 : index
      %c0_82 = arith.constant 0 : index
      %c0_83 = arith.constant 0 : index
      %179 = vector.load %arg2[%c0_81, %c0_82, %c0_83] : memref<1x8x32xbf16, #tpu.memory_space<vmem>>, vector<1x8x32xbf16>
      %180 = vector.shape_cast %179 : vector<1x8x32xbf16> to vector<8x32xbf16>
      %181 = arith.extf %180 : vector<8x32xbf16> to vector<8x32xf32>
      %cst_84 = arith.constant 5.65685415 : f32
      %182 = vector.broadcast %cst_84 : f32 to vector<8x32xf32>
      %183 = arith.mulf %181, %182 : vector<8x32xf32>
      %c0_85 = arith.constant 0 : index
      %c0_86 = arith.constant 0 : index
      %184 = vector.load %arg3[%c0_85, %c0_86] : memref<8x32xf32, #tpu.memory_space<vmem>>, vector<8x32xf32>
      %185 = arith.addf %183, %184 : vector<8x32xf32>
      %c0_87 = arith.constant 0 : index
      %c0_88 = arith.constant 0 : index
      %186 = vector.load %arg18[%c0_87, %c0_88] : memref<8x32xf32, #tpu.memory_space<vmem>>, vector<8x32xf32>
      tpu.vector_store %arg18[%c0_87, %c0_88], %185 {strides = array<i32>} : memref<8x32xf32, #tpu.memory_space<vmem>>, vector<8x32xf32>,
    } else {
    }
    %c0 = arith.constant 0 : index
    %c0_1 = arith.constant 0 : index
    %3 = vector.load %arg18[%c0, %c0_1] : memref<8x32xf32, #tpu.memory_space<vmem>>, vector<8x32xf32>
    %c0_2 = arith.constant 0 : index
    %c0_3 = arith.constant 0 : index
    %c0_4 = arith.constant 0 : index
    %4 = vector.load %arg4[%c0_2, %c0_3, %c0_4] : memref<1x1x8xf32, #tpu.memory_space<vmem>>, vector<1x1x8xf32>
    %5 = vector.shape_cast %4 : vector<1x1x8xf32> to vector<1x8xf32>
    %6 = arith.truncf %3 : vector<8x32xf32> to vector<8x32xbf16>
    %c0_5 = arith.constant 0 : index
    %c0_6 = arith.constant 0 : index
    %c0_7 = arith.constant 0 : index
    %7 = vector.load %arg5[%c0_5, %c0_6, %c0_7] : memref<1x32x96xbf16, #tpu.memory_space<vmem>>, vector<1x32x96xbf16>
    %8 = vector.shape_cast %7 : vector<1x32x96xbf16> to vector<32x96xbf16>
    %cst = arith.constant dense<0.000000e+00> : vector<8x96xf32>
    %9 = tpu.matmul %6, %8, %cst {dimension_numbers = #tpu.dot_dimension_numbers<[1], [0], [0], [1], [0, 0, 1, 1], [], []>} : vector<8x32xbf16>, vector<32x96xbf16>, vector<8x96xf32> -> vector<8x96xf32>
    %c0_8 = arith.constant 0 : index
    %c0_9 = arith.constant 0 : index
    %c0_10 = arith.constant 0 : index
    %10 = vector.load %arg6[%c0_8, %c0_9, %c0_10] : memref<1x1x96xf32, #tpu.memory_space<vmem>>, vector<1x1x96xf32>
    %11 = vector.shape_cast %10 : vector<1x1x96xf32> to vector<1x96xf32>
    %12 = vector.broadcast %11 : vector<1x96xf32> to vector<8x96xf32>
    %13 = arith.addf %9, %12 : vector<8x96xf32>
    %14 = arith.truncf %13 : vector<8x96xf32> to vector<8x96xbf16>
    %15 = vector.extract_strided_slice %14 {offsets = [0, 0], sizes = [8, 8], strides = [1, 1]} : vector<8x96xbf16> to vector<8x8xbf16>
    %16 = vector.extract_strided_slice %14 {offsets = [0, 32], sizes = [8, 8], strides = [1, 1]} : vector<8x96xbf16> to vector<8x8xbf16>
    %17 = vector.extract_strided_slice %14 {offsets = [0, 64], sizes = [8, 8], strides = [1, 1]} : vector<8x96xbf16> to vector<8x8xbf16>
    %cst_11 = arith.constant dense<0.000000e+00> : vector<8x8xf32>
    %18 = tpu.matmul %15, %16, %cst_11 {dimension_numbers = #tpu.dot_dimension_numbers<[1], [1], [0], [0], [0, 0, 1, 0], [], []>} : vector<8x8xbf16>, vector<8x8xbf16>, vector<8x8xf32> -> vector<8x8xf32>
    %19 = vector.broadcast %5 : vector<1x8xf32> to vector<8x8xf32>
    %20 = arith.addf %18, %19 : vector<8x8xf32>
    %cst_12 = arith.constant dense<0xFF800000> : vector<8xf32>
    %21 = vector.multi_reduction <maximumf>, %20, %cst_12 [1] : vector<8x8xf32> to vector<8xf32>
    %22 = vector.shape_cast %21 : vector<8xf32> to vector<8x1xf32>
    %23 = vector.broadcast %22 : vector<8x1xf32> to vector<8x8xf32>
    %24 = arith.subf %20, %23 : vector<8x8xf32>
    %25 = math.exp %24 : vector<8x8xf32>
    %cst_13 = arith.constant dense<0.000000e+00> : vector<8xf32>
    %26 = vector.multi_reduction <add>, %25, %cst_13 [1] : vector<8x8xf32> to vector<8xf32>
    %27 = vector.shape_cast %26 : vector<8xf32> to vector<8x1xf32>
    %28 = tpu.reciprocal %27 {approx = true} : vector<8x1xf32> -> vector<8x1xf32>
    %29 = vector.broadcast %28 : vector<8x1xf32> to vector<8x8xf32>
    %30 = arith.mulf %25, %29 : vector<8x8xf32>
    %31 = arith.truncf %30 : vector<8x8xf32> to vector<8x8xbf16>
    %cst_14 = arith.constant dense<0.000000e+00> : vector<8x8xf32>
    %32 = tpu.matmul %31, %17, %cst_14 {dimension_numbers = #tpu.dot_dimension_numbers<[1], [0], [0], [1], [0, 0, 1, 1], [], []>} : vector<8x8xbf16>, vector<8x8xbf16>, vector<8x8xf32> -> vector<8x8xf32>
    %33 = arith.truncf %32 : vector<8x8xf32> to vector<8x8xbf16>
    %c0_15 = arith.constant 0 : index
    %c0_16 = arith.constant 0 : index
    %34 = vector.load %arg19[%c0_15, %c0_16] : memref<8x32xbf16, #tpu.memory_space<vmem>>, vector<8x8xbf16>
    tpu.vector_store %arg19[%c0_15, %c0_16], %33 {strides = array<i32>} : memref<8x32xbf16, #tpu.memory_space<vmem>>, vector<8x8xbf16>,
    %35 = vector.extract_strided_slice %14 {offsets = [0, 8], sizes = [8, 8], strides = [1, 1]} : vector<8x96xbf16> to vector<8x8xbf16>
    %36 = vector.extract_strided_slice %14 {offsets = [0, 40], sizes = [8, 8], strides = [1, 1]} : vector<8x96xbf16> to vector<8x8xbf16>
    %37 = vector.extract_strided_slice %14 {offsets = [0, 72], sizes = [8, 8], strides = [1, 1]} : vector<8x96xbf16> to vector<8x8xbf16>
    %cst_17 = arith.constant dense<0.000000e+00> : vector<8x8xf32>
    %38 = tpu.matmul %35, %36, %cst_17 {dimension_numbers = #tpu.dot_dimension_numbers<[1], [1], [0], [0], [0, 0, 1, 0], [], []>} : vector<8x8xbf16>, vector<8x8xbf16>, vector<8x8xf32> -> vector<8x8xf32>
    %39 = vector.broadcast %5 : vector<1x8xf32> to vector<8x8xf32>
    %40 = arith.addf %38, %39 : vector<8x8xf32>
    %cst_18 = arith.constant dense<0xFF800000> : vector<8xf32>
    %41 = vector.multi_reduction <maximumf>, %40, %cst_18 [1] : vector<8x8xf32> to vector<8xf32>
    %42 = vector.shape_cast %41 : vector<8xf32> to vector<8x1xf32>
    %43 = vector.broadcast %42 : vector<8x1xf32> to vector<8x8xf32>
    %44 = arith.subf %40, %43 : vector<8x8xf32>
    %45 = math.exp %44 : vector<8x8xf32>
    %cst_19 = arith.constant dense<0.000000e+00> : vector<8xf32>
    %46 = vector.multi_reduction <add>, %45, %cst_19 [1] : vector<8x8xf32> to vector<8xf32>
    %47 = vector.shape_cast %46 : vector<8xf32> to vector<8x1xf32>
    %48 = tpu.reciprocal %47 {approx = true} : vector<8x1xf32> -> vector<8x1xf32>
    %49 = vector.broadcast %48 : vector<8x1xf32> to vector<8x8xf32>
    %50 = arith.mulf %45, %49 : vector<8x8xf32>
    %51 = arith.truncf %50 : vector<8x8xf32> to vector<8x8xbf16>
    %cst_20 = arith.constant dense<0.000000e+00> : vector<8x8xf32>
    %52 = tpu.matmul %51, %37, %cst_20 {dimension_numbers = #tpu.dot_dimension_numbers<[1], [0], [0], [1], [0, 0, 1, 1], [], []>} : vector<8x8xbf16>, vector<8x8xbf16>, vector<8x8xf32> -> vector<8x8xf32>
    %53 = arith.truncf %52 : vector<8x8xf32> to vector<8x8xbf16>
    %c0_21 = arith.constant 0 : index
    %c8 = arith.constant 8 : index
    %54 = vector.load %arg19[%c0_21, %c8] : memref<8x32xbf16, #tpu.memory_space<vmem>>, vector<8x8xbf16>
    tpu.vector_store %arg19[%c0_21, %c8], %53 {strides = array<i32>} : memref<8x32xbf16, #tpu.memory_space<vmem>>, vector<8x8xbf16>,
    %55 = vector.extract_strided_slice %14 {offsets = [0, 16], sizes = [8, 8], strides = [1, 1]} : vector<8x96xbf16> to vector<8x8xbf16>
    %56 = vector.extract_strided_slice %14 {offsets = [0, 48], sizes = [8, 8], strides = [1, 1]} : vector<8x96xbf16> to vector<8x8xbf16>
    %57 = vector.extract_strided_slice %14 {offsets = [0, 80], sizes = [8, 8], strides = [1, 1]} : vector<8x96xbf16> to vector<8x8xbf16>
    %cst_22 = arith.constant dense<0.000000e+00> : vector<8x8xf32>
    %58 = tpu.matmul %55, %56, %cst_22 {dimension_numbers = #tpu.dot_dimension_numbers<[1], [1], [0], [0], [0, 0, 1, 0], [], []>} : vector<8x8xbf16>, vector<8x8xbf16>, vector<8x8xf32> -> vector<8x8xf32>
    %59 = vector.broadcast %5 : vector<1x8xf32> to vector<8x8xf32>
    %60 = arith.addf %58, %59 : vector<8x8xf32>
    %cst_23 = arith.constant dense<0xFF800000> : vector<8xf32>
    %61 = vector.multi_reduction <maximumf>, %60, %cst_23 [1] : vector<8x8xf32> to vector<8xf32>
    %62 = vector.shape_cast %61 : vector<8xf32> to vector<8x1xf32>
    %63 = vector.broadcast %62 : vector<8x1xf32> to vector<8x8xf32>
    %64 = arith.subf %60, %63 : vector<8x8xf32>
    %65 = math.exp %64 : vector<8x8xf32>
    %cst_24 = arith.constant dense<0.000000e+00> : vector<8xf32>
    %66 = vector.multi_reduction <add>, %65, %cst_24 [1] : vector<8x8xf32> to vector<8xf32>
    %67 = vector.shape_cast %66 : vector<8xf32> to vector<8x1xf32>
    %68 = tpu.reciprocal %67 {approx = true} : vector<8x1xf32> -> vector<8x1xf32>
    %69 = vector.broadcast %68 : vector<8x1xf32> to vector<8x8xf32>
    %70 = arith.mulf %65, %69 : vector<8x8xf32>
    %71 = arith.truncf %70 : vector<8x8xf32> to vector<8x8xbf16>
    %cst_25 = arith.constant dense<0.000000e+00> : vector<8x8xf32>
    %72 = tpu.matmul %71, %57, %cst_25 {dimension_numbers = #tpu.dot_dimension_numbers<[1], [0], [0], [1], [0, 0, 1, 1], [], []>} : vector<8x8xbf16>, vector<8x8xbf16>, vector<8x8xf32> -> vector<8x8xf32>
    %73 = arith.truncf %72 : vector<8x8xf32> to vector<8x8xbf16>
    %c0_26 = arith.constant 0 : index
    %c16 = arith.constant 16 : index
    %74 = vector.load %arg19[%c0_26, %c16] : memref<8x32xbf16, #tpu.memory_space<vmem>>, vector<8x8xbf16>
    tpu.vector_store %arg19[%c0_26, %c16], %73 {strides = array<i32>} : memref<8x32xbf16, #tpu.memory_space<vmem>>, vector<8x8xbf16>,
    %75 = vector.extract_strided_slice %14 {offsets = [0, 24], sizes = [8, 8], strides = [1, 1]} : vector<8x96xbf16> to vector<8x8xbf16>
    %76 = vector.extract_strided_slice %14 {offsets = [0, 56], sizes = [8, 8], strides = [1, 1]} : vector<8x96xbf16> to vector<8x8xbf16>
    %77 = vector.extract_strided_slice %14 {offsets = [0, 88], sizes = [8, 8], strides = [1, 1]} : vector<8x96xbf16> to vector<8x8xbf16>
    %cst_27 = arith.constant dense<0.000000e+00> : vector<8x8xf32>
    %78 = tpu.matmul %75, %76, %cst_27 {dimension_numbers = #tpu.dot_dimension_numbers<[1], [1], [0], [0], [0, 0, 1, 0], [], []>} : vector<8x8xbf16>, vector<8x8xbf16>, vector<8x8xf32> -> vector<8x8xf32>
    %79 = vector.broadcast %5 : vector<1x8xf32> to vector<8x8xf32>
    %80 = arith.addf %78, %79 : vector<8x8xf32>
    %cst_28 = arith.constant dense<0xFF800000> : vector<8xf32>
    %81 = vector.multi_reduction <maximumf>, %80, %cst_28 [1] : vector<8x8xf32> to vector<8xf32>
    %82 = vector.shape_cast %81 : vector<8xf32> to vector<8x1xf32>
    %83 = vector.broadcast %82 : vector<8x1xf32> to vector<8x8xf32>
    %84 = arith.subf %80, %83 : vector<8x8xf32>
    %85 = math.exp %84 : vector<8x8xf32>
    %cst_29 = arith.constant dense<0.000000e+00> : vector<8xf32>
    %86 = vector.multi_reduction <add>, %85, %cst_29 [1] : vector<8x8xf32> to vector<8xf32>
    %87 = vector.shape_cast %86 : vector<8xf32> to vector<8x1xf32>
    %88 = tpu.reciprocal %87 {approx = true} : vector<8x1xf32> -> vector<8x1xf32>
    %89 = vector.broadcast %88 : vector<8x1xf32> to vector<8x8xf32>
    %90 = arith.mulf %85, %89 : vector<8x8xf32>
    %91 = arith.truncf %90 : vector<8x8xf32> to vector<8x8xbf16>
    %cst_30 = arith.constant dense<0.000000e+00> : vector<8x8xf32>
    %92 = tpu.matmul %91, %77, %cst_30 {dimension_numbers = #tpu.dot_dimension_numbers<[1], [0], [0], [1], [0, 0, 1, 1], [], []>} : vector<8x8xbf16>, vector<8x8xbf16>, vector<8x8xf32> -> vector<8x8xf32>
    %93 = arith.truncf %92 : vector<8x8xf32> to vector<8x8xbf16>
    %c0_31 = arith.constant 0 : index
    %c24 = arith.constant 24 : index
    %94 = vector.load %arg19[%c0_31, %c24] : memref<8x32xbf16, #tpu.memory_space<vmem>>, vector<8x8xbf16>
    tpu.vector_store %arg19[%c0_31, %c24], %93 {strides = array<i32>} : memref<8x32xbf16, #tpu.memory_space<vmem>>, vector<8x8xbf16>,
    %c0_32 = arith.constant 0 : index
    %c0_33 = arith.constant 0 : index
    %95 = vector.load %arg19[%c0_32, %c0_33] : memref<8x32xbf16, #tpu.memory_space<vmem>>, vector<8x32xbf16>
    %c0_34 = arith.constant 0 : index
    %c0_35 = arith.constant 0 : index
    %c0_36 = arith.constant 0 : index
    %96 = vector.load %arg7[%c0_34, %c0_35, %c0_36] : memref<1x32x32xbf16, #tpu.memory_space<vmem>>, vector<1x32x32xbf16>
    %97 = vector.shape_cast %96 : vector<1x32x32xbf16> to vector<32x32xbf16>
    %cst_37 = arith.constant dense<0.000000e+00> : vector<8x32xf32>
    %98 = tpu.matmul %95, %97, %cst_37 {dimension_numbers = #tpu.dot_dimension_numbers<[1], [0], [0], [1], [0, 0, 1, 1], [], []>} : vector<8x32xbf16>, vector<32x32xbf16>, vector<8x32xf32> -> vector<8x32xf32>
    %c0_38 = arith.constant 0 : index
    %c0_39 = arith.constant 0 : index
    %c0_40 = arith.constant 0 : index
    %99 = vector.load %arg8[%c0_38, %c0_39, %c0_40] : memref<1x1x32xf32, #tpu.memory_space<vmem>>, vector<1x1x32xf32>
    %100 = vector.shape_cast %99 : vector<1x1x32xf32> to vector<1x32xf32>
    %101 = vector.broadcast %100 : vector<1x32xf32> to vector<8x32xf32>
    %102 = arith.addf %98, %101 : vector<8x32xf32>
    %103 = arith.addf %3, %102 : vector<8x32xf32>
    %cst_41 = arith.constant dense<0.000000e+00> : vector<8xf32>
    %104 = vector.multi_reduction <add>, %103, %cst_41 [1] : vector<8x32xf32> to vector<8xf32>
    %105 = vector.shape_cast %104 : vector<8xf32> to vector<8x1xf32>
    %cst_42 = arith.constant 3.200000e+01 : f32
    %106 = vector.broadcast %cst_42 : f32 to vector<8x1xf32>
    %107 = arith.divf %105, %106 : vector<8x1xf32>
    %108 = vector.broadcast %107 : vector<8x1xf32> to vector<8x32xf32>
    %109 = arith.subf %103, %108 : vector<8x32xf32>
    %110 = arith.mulf %109, %109 : vector<8x32xf32>
    %cst_43 = arith.constant dense<0.000000e+00> : vector<8xf32>
    %111 = vector.multi_reduction <add>, %110, %cst_43 [1] : vector<8x32xf32> to vector<8xf32>
    %112 = vector.shape_cast %111 : vector<8xf32> to vector<8x1xf32>
    %cst_44 = arith.constant 3.200000e+01 : f32
    %113 = vector.broadcast %cst_44 : f32 to vector<8x1xf32>
    %114 = arith.divf %112, %113 : vector<8x1xf32>
    %115 = vector.broadcast %107 : vector<8x1xf32> to vector<8x32xf32>
    %116 = arith.subf %103, %115 : vector<8x32xf32>
    %cst_45 = arith.constant 9.99999974E-6 : f32
    %117 = vector.broadcast %cst_45 : f32 to vector<8x1xf32>
    %118 = arith.addf %114, %117 : vector<8x1xf32>
    %119 = math.rsqrt %118 : vector<8x1xf32>
    %120 = vector.broadcast %119 : vector<8x1xf32> to vector<8x32xf32>
    %121 = arith.mulf %116, %120 : vector<8x32xf32>
    %c0_46 = arith.constant 0 : index
    %c0_47 = arith.constant 0 : index
    %c0_48 = arith.constant 0 : index
    %122 = vector.load %arg9[%c0_46, %c0_47, %c0_48] : memref<1x1x32xf32, #tpu.memory_space<vmem>>, vector<1x1x32xf32>
    %123 = vector.shape_cast %122 : vector<1x1x32xf32> to vector<1x32xf32>
    %124 = vector.broadcast %123 : vector<1x32xf32> to vector<8x32xf32>
    %125 = arith.mulf %121, %124 : vector<8x32xf32>
    %c0_49 = arith.constant 0 : index
    %c0_50 = arith.constant 0 : index
    %c0_51 = arith.constant 0 : index
    %126 = vector.load %arg10[%c0_49, %c0_50, %c0_51] : memref<1x1x32xf32, #tpu.memory_space<vmem>>, vector<1x1x32xf32>
    %127 = vector.shape_cast %126 : vector<1x1x32xf32> to vector<1x32xf32>
    %128 = vector.broadcast %127 : vector<1x32xf32> to vector<8x32xf32>
    %129 = arith.addf %125, %128 : vector<8x32xf32>
    %130 = arith.truncf %129 : vector<8x32xf32> to vector<8x32xbf16>
    %c0_52 = arith.constant 0 : index
    %c0_53 = arith.constant 0 : index
    %c0_54 = arith.constant 0 : index
    %131 = vector.load %arg13[%c0_52, %c0_53, %c0_54] : memref<1x32x64xbf16, #tpu.memory_space<vmem>>, vector<1x32x64xbf16>
    %132 = vector.shape_cast %131 : vector<1x32x64xbf16> to vector<32x64xbf16>
    %cst_55 = arith.constant dense<0.000000e+00> : vector<8x64xf32>
    %133 = tpu.matmul %130, %132, %cst_55 {dimension_numbers = #tpu.dot_dimension_numbers<[1], [0], [0], [1], [0, 0, 1, 1], [], []>} : vector<8x32xbf16>, vector<32x64xbf16>, vector<8x64xf32> -> vector<8x64xf32>
    %c0_56 = arith.constant 0 : index
    %c0_57 = arith.constant 0 : index
    %c0_58 = arith.constant 0 : index
    %134 = vector.load %arg14[%c0_56, %c0_57, %c0_58] : memref<1x1x64xf32, #tpu.memory_space<vmem>>, vector<1x1x64xf32>
    %135 = vector.shape_cast %134 : vector<1x1x64xf32> to vector<1x64xf32>
    %136 = vector.broadcast %135 : vector<1x64xf32> to vector<8x64xf32>
    %137 = arith.addf %133, %136 : vector<8x64xf32>
    %cst_59 = arith.constant 0.000000e+00 : f32
    %138 = vector.broadcast %cst_59 : f32 to vector<8x64xf32>
    %139 = arith.maximumf %137, %138 : vector<8x64xf32>
    %140 = arith.truncf %139 : vector<8x64xf32> to vector<8x64xbf16>
    %c0_60 = arith.constant 0 : index
    %c0_61 = arith.constant 0 : index
    %c0_62 = arith.constant 0 : index
    %141 = vector.load %arg15[%c0_60, %c0_61, %c0_62] : memref<1x64x32xbf16, #tpu.memory_space<vmem>>, vector<1x64x32xbf16>
    %142 = vector.shape_cast %141 : vector<1x64x32xbf16> to vector<64x32xbf16>
    %cst_63 = arith.constant dense<0.000000e+00> : vector<8x32xf32>
    %143 = tpu.matmul %140, %142, %cst_63 {dimension_numbers = #tpu.dot_dimension_numbers<[1], [0], [0], [1], [0, 0, 1, 1], [], []>} : vector<8x64xbf16>, vector<64x32xbf16>, vector<8x32xf32> -> vector<8x32xf32>
    %c0_64 = arith.constant 0 : index
    %c0_65 = arith.constant 0 : index
    %c0_66 = arith.constant 0 : index
    %144 = vector.load %arg16[%c0_64, %c0_65, %c0_66] : memref<1x1x32xf32, #tpu.memory_space<vmem>>, vector<1x1x32xf32>
    %145 = vector.shape_cast %144 : vector<1x1x32xf32> to vector<1x32xf32>
    %146 = vector.broadcast %145 : vector<1x32xf32> to vector<8x32xf32>
    %147 = arith.addf %143, %146 : vector<8x32xf32>
    %148 = arith.addf %129, %147 : vector<8x32xf32>
    %cst_67 = arith.constant dense<0.000000e+00> : vector<8xf32>
    %149 = vector.multi_reduction <add>, %148, %cst_67 [1] : vector<8x32xf32> to vector<8xf32>
    %150 = vector.shape_cast %149 : vector<8xf32> to vector<8x1xf32>
    %cst_68 = arith.constant 3.200000e+01 : f32
    %151 = vector.broadcast %cst_68 : f32 to vector<8x1xf32>
    %152 = arith.divf %150, %151 : vector<8x1xf32>
    %153 = vector.broadcast %152 : vector<8x1xf32> to vector<8x32xf32>
    %154 = arith.subf %148, %153 : vector<8x32xf32>
    %155 = arith.mulf %154, %154 : vector<8x32xf32>
    %cst_69 = arith.constant dense<0.000000e+00> : vector<8xf32>
    %156 = vector.multi_reduction <add>, %155, %cst_69 [1] : vector<8x32xf32> to vector<8xf32>
    %157 = vector.shape_cast %156 : vector<8xf32> to vector<8x1xf32>
    %cst_70 = arith.constant 3.200000e+01 : f32
    %158 = vector.broadcast %cst_70 : f32 to vector<8x1xf32>
    %159 = arith.divf %157, %158 : vector<8x1xf32>
    %160 = vector.broadcast %152 : vector<8x1xf32> to vector<8x32xf32>
    %161 = arith.subf %148, %160 : vector<8x32xf32>
    %cst_71 = arith.constant 9.99999974E-6 : f32
    %162 = vector.broadcast %cst_71 : f32 to vector<8x1xf32>
    %163 = arith.addf %159, %162 : vector<8x1xf32>
    %164 = math.rsqrt %163 : vector<8x1xf32>
    %165 = vector.broadcast %164 : vector<8x1xf32> to vector<8x32xf32>
    %166 = arith.mulf %161, %165 : vector<8x32xf32>
    %c0_72 = arith.constant 0 : index
    %c0_73 = arith.constant 0 : index
    %c0_74 = arith.constant 0 : index
    %167 = vector.load %arg11[%c0_72, %c0_73, %c0_74] : memref<1x1x32xf32, #tpu.memory_space<vmem>>, vector<1x1x32xf32>
    %168 = vector.shape_cast %167 : vector<1x1x32xf32> to vector<1x32xf32>
    %169 = vector.broadcast %168 : vector<1x32xf32> to vector<8x32xf32>
    %170 = arith.mulf %166, %169 : vector<8x32xf32>
    %c0_75 = arith.constant 0 : index
    %c0_76 = arith.constant 0 : index
    %c0_77 = arith.constant 0 : index
    %171 = vector.load %arg12[%c0_75, %c0_76, %c0_77] : memref<1x1x32xf32, #tpu.memory_space<vmem>>, vector<1x1x32xf32>
    %172 = vector.shape_cast %171 : vector<1x1x32xf32> to vector<1x32xf32>
    %173 = vector.broadcast %172 : vector<1x32xf32> to vector<8x32xf32>
    %174 = arith.addf %170, %173 : vector<8x32xf32>
    %c0_78 = arith.constant 0 : index
    %c0_79 = arith.constant 0 : index
    %175 = vector.load %arg18[%c0_78, %c0_79] : memref<8x32xf32, #tpu.memory_space<vmem>>, vector<8x32xf32>
    tpu.vector_store %arg18[%c0_78, %c0_79], %174 {strides = array<i32>} : memref<8x32xf32, #tpu.memory_space<vmem>>, vector<8x32xf32>,
    %c1_i32 = arith.constant 1 : i32
    %176 = arith.cmpi eq, %arg1, %c1_i32 : i32
    %177 = arith.extui %176 : i1 to i32
    %c0_i32_80 = arith.constant 0 : i32
    %178 = arith.cmpi ne, %177, %c0_i32_80 : i32
    scf.if %178 {
      %c0_81 = arith.constant 0 : index
      %c0_82 = arith.constant 0 : index
      %c0_83 = arith.constant 0 : index
      %179 = vector.load %arg17[%c0_81, %c0_82, %c0_83] : memref<1x8x32xf32, #tpu.memory_space<vmem>>, vector<1x8x32xf32>
      %180 = vector.shape_cast %179 : vector<1x8x32xf32> to vector<8x32xf32>
      %181 = vector.shape_cast %174 : vector<8x32xf32> to vector<1x8x32xf32>
      tpu.vector_store %arg17[%c0_81, %c0_82, %c0_83], %181 {strides = array<i32>} : memref<1x8x32xf32, #tpu.memory_space<vmem>>, vector<1x8x32xf32>,
    } else {
    }
    return
  }
  func.func @transform_0(%arg0: i32, %arg1: i32) -> (i32, i32, i32) {
    %c0_i32 = arith.constant 0 : i32
    %c0_i32_0 = arith.constant 0 : i32
    %c0_i32_1 = arith.constant 0 : i32
    return %arg0, %c0_i32, %c0_i32_0 : i32, i32, i32
  }
  func.func @transform_1(%arg0: i32, %arg1: i32) -> (i32, i32) {
    %c0_i32 = arith.constant 0 : i32
    %c0_i32_0 = arith.constant 0 : i32
    %c0_i32_1 = arith.constant 0 : i32
    return %c0_i32, %c0_i32_0 : i32, i32
  }
  func.func @transform_2(%arg0: i32, %arg1: i32) -> (i32, i32, i32) {
    %c0_i32 = arith.constant 0 : i32
    %c0_i32_0 = arith.constant 0 : i32
    %c0_i32_1 = arith.constant 0 : i32
    return %arg0, %c0_i32, %c0_i32_0 : i32, i32, i32
  }
  func.func @transform_3(%arg0: i32, %arg1: i32) -> (i32, i32, i32) {
    %c0_i32 = arith.constant 0 : i32
    %c0_i32_0 = arith.constant 0 : i32
    %c0_i32_1 = arith.constant 0 : i32
    return %arg1, %c0_i32, %c0_i32_0 : i32, i32, i32
  }
  func.func @transform_4(%arg0: i32, %arg1: i32) -> (i32, i32, i32) {
    %c0_i32 = arith.constant 0 : i32
    %c0_i32_0 = arith.constant 0 : i32
    %c0_i32_1 = arith.constant 0 : i32
    return %arg1, %c0_i32, %c0_i32_0 : i32, i32, i32
  }
  func.func @transform_5(%arg0: i32, %arg1: i32) -> (i32, i32, i32) {
    %c0_i32 = arith.constant 0 : i32
    %c0_i32_0 = arith.constant 0 : i32
    %c0_i32_1 = arith.constant 0 : i32
    return %arg1, %c0_i32, %c0_i32_0 : i32, i32, i32
  }
  func.func @transform_6(%arg0: i32, %arg1: i32) -> (i32, i32, i32) {
    %c0_i32 = arith.constant 0 : i32
    %c0_i32_0 = arith.constant 0 : i32
    %c0_i32_1 = arith.constant 0 : i32
    return %arg1, %c0_i32, %c0_i32_0 : i32, i32, i32
  }
  func.func @transform_7(%arg0: i32, %arg1: i32) -> (i32, i32, i32) {
    %c0_i32 = arith.constant 0 : i32
    %c0_i32_0 = arith.constant 0 : i32
    %c0_i32_1 = arith.constant 0 : i32
    return %arg1, %c0_i32, %c0_i32_0 : i32, i32, i32
  }
  func.func @transform_8(%arg0: i32, %arg1: i32) -> (i32, i32, i32) {
    %c0_i32 = arith.constant 0 : i32
    %c0_i32_0 = arith.constant 0 : i32
    %c0_i32_1 = arith.constant 0 : i32
    return %arg1, %c0_i32, %c0_i32_0 : i32, i32, i32
  }
  func.func @transform_9(%arg0: i32, %arg1: i32) -> (i32, i32, i32) {
    %c0_i32 = arith.constant 0 : i32
    %c0_i32_0 = arith.constant 0 : i32
    %c0_i32_1 = arith.constant 0 : i32
    return %arg1, %c0_i32, %c0_i32_0 : i32, i32, i32
  }
  func.func @transform_10(%arg0: i32, %arg1: i32) -> (i32, i32, i32) {
    %c0_i32 = arith.constant 0 : i32
    %c0_i32_0 = arith.constant 0 : i32
    %c0_i32_1 = arith.constant 0 : i32
    return %arg1, %c0_i32, %c0_i32_0 : i32, i32, i32
  }
  func.func @transform_11(%arg0: i32, %arg1: i32) -> (i32, i32, i32) {
    %c0_i32 = arith.constant 0 : i32
    %c0_i32_0 = arith.constant 0 : i32
    %c0_i32_1 = arith.constant 0 : i32
    return %arg1, %c0_i32, %c0_i32_0 : i32, i32, i32
  }
  func.func @transform_12(%arg0: i32, %arg1: i32) -> (i32, i32, i32) {
    %c0_i32 = arith.constant 0 : i32
    %c0_i32_0 = arith.constant 0 : i32
    %c0_i32_1 = arith.constant 0 : i32
    return %arg1, %c0_i32, %c0_i32_0 : i32, i32, i32
  }
  func.func @transform_13(%arg0: i32, %arg1: i32) -> (i32, i32, i32) {
    %c0_i32 = arith.constant 0 : i32
    %c0_i32_0 = arith.constant 0 : i32
    %c0_i32_1 = arith.constant 0 : i32
    return %arg1, %c0_i32, %c0_i32_0 : i32, i32, i32
  }
  func.func @transform_14(%arg0: i32, %arg1: i32) -> (i32, i32, i32) {
    %c0_i32 = arith.constant 0 : i32
    %c0_i32_0 = arith.constant 0 : i32
    %c0_i32_1 = arith.constant 0 : i32
    return %arg1, %c0_i32, %c0_i32_0 : i32, i32, i32
  }
  func.func @transform_15(%arg0: i32, %arg1: i32) -> (i32, i32, i32) {
    %c0_i32 = arith.constant 0 : i32
    %c0_i32_0 = arith.constant 0 : i32
    %c0_i32_1 = arith.constant 0 : i32
    return %arg0, %c0_i32, %c0_i32_0 : i32, i32, i32
  }
}

</mosaic_0001>

<llo_original>
// kernel: tpu_custom_call.1
$region0: #{tpu_custom_call.1}
  #allocation0 [shape = 'u32[]', space=smem, size = 0x4, offset = 0x4, fixed_abs, tag = 'smem constant byte address 0x4 - core index']
  #allocation1 [shape = 'u32[144,128]{1,0:T(1,128)}', space=vmem, size = 0x12000, scoped, tag = 'internal scratch']
  #allocation2 [shape = 'f32[8,32]{1,0:T(8,128)}', space=vmem, size = 0x1000, scoped, tag = 'scratch operand']
  #allocation3 [shape = 'bf16[8,32]{1,0:T(8,128)(2,1)}', space=vmem, size = 0x800, scoped, tag = 'scratch operand']
  %s0 = inlined_call_operand.hbm [shape: bf16[2,8,32], index: 0, kind: input, shape index: {}]
  %s1 = inlined_call_operand.hbm [shape: f32[8,32], index: 1, kind: input, shape index: {}]
  %s2 = inlined_call_operand.vmem [shape: f32[2,1,8], index: 2, kind: input, shape index: {}]
  %s3 = inlined_call_operand.vmem [shape: bf16[2,32,96], index: 3, kind: input, shape index: {}]
  %s4 = inlined_call_operand.vmem [shape: f32[2,1,96], index: 4, kind: input, shape index: {}]
  %s5 = inlined_call_operand.vmem [shape: bf16[2,32,32], index: 5, kind: input, shape index: {}]
  %s6 = inlined_call_operand.vmem [shape: f32[2,1,32], index: 6, kind: input, shape index: {}]
  %s7 = inlined_call_operand.vmem [shape: f32[2,1,32], index: 7, kind: input, shape index: {}]
  %s8 = inlined_call_operand.vmem [shape: f32[2,1,32], index: 8, kind: input, shape index: {}]
  %s9 = inlined_call_operand.vmem [shape: f32[2,1,32], index: 9, kind: input, shape index: {}]
  %s10 = inlined_call_operand.vmem [shape: f32[2,1,32], index: 10, kind: input, shape index: {}]
  %s11 = inlined_call_operand.vmem [shape: bf16[2,32,64], index: 11, kind: input, shape index: {}]
  %s12 = inlined_call_operand.vmem [shape: f32[2,1,64], index: 12, kind: input, shape index: {}]
  %s13 = inlined_call_operand.vmem [shape: bf16[2,64,32], index: 13, kind: input, shape index: {}]
  %s14 = inlined_call_operand.vmem [shape: f32[2,1,32], index: 14, kind: input, shape index: {}]
  %s15 = inlined_call_operand.hbm [shape: f32[2,8,32], index: 15, kind: output, shape index: {}]
  %s16 = sld [smem:[#allocation0]]
  $region109: #{tpu_custom_call.1} parent=0
    _
  %s18 = ssub.s32 1, %s16
  %s19 = scalar_select 0, %s18, %s16
  $region1: #{tpu_custom_call.1} parent=0
    #allocation4 [shape = 'u8[4096]{0}', space=vmem, size = 0x1000, scoped, tag = 'input window, operand 0']
    #allocation5 [shape = 's32[2]{0}', space=sflag, size = 0x8, scoped, tag = 'scoped memory for tpu_custom_call.1']
    #allocation6 [shape = 's32[2]{0}', space=sflag, size = 0x8, scoped, tag = 'scoped memory for tpu_custom_call.1']
    #allocation7 [shape = 'u8[4096]{0}', space=vmem, size = 0x1000, scoped, tag = 'input window, operand 1, single buffered']
    #allocation8 [shape = 's32[1]{0}', space=sflag, size = 0x4, scoped, tag = 'scoped memory for tpu_custom_call.1']
    #allocation9 [shape = 'u8[8192]{0}', space=vmem, size = 0x2000, scoped, tag = 'output window, operand 0']
    %20 = vsyncpa [#allocation5], 0
    %s21 = scalar_lea.sflag [#allocation5], 1
    %22 = vsyncpa %s21, 0
    %23 = vsyncpa [#allocation8], 0
    %24 = vsyncpa [#allocation6], 0
    %s25 = scalar_lea.sflag [#allocation6], 1
    %26 = vsyncpa %s25, 0
    loop: start=0, step=1, limit=6
    $region2: #{tpu_custom_call.1} parent=1 // loop_pre_header
      _
    $region3: #{tpu_custom_call.1} parent=1 // loop_header
      %s28 = sphi 0, %s32
      %p29 = scmp.ge.s32.totalorder %s28, 6
      %s35 = sphi 0, %s47
      %s36 = sphi 0, %s43
      %s37 = sphi 0, %s35
      %s38 = sphi 0, %s36
      %s39 = sphi 0, %s37
      %s40 = sphi 0, %s38
      %s50 = sphi 0, %s52
      %s53 = sphi 0, %s50
      %s54 = sphi 0, %s53
      %s70 = sphi 0, %s54
      %s74 = sphi 0, %s74
      %s76 = sphi 0, %s74
      %s77 = sphi 0, %s76
      %s91 = sphi 0, %s77
      %s97 = sphi 0, %s99
      %s100 = sphi 0, %s97
      %s101 = sphi 0, %s100
      %s117 = sphi 0, %s101
      %s123 = sphi 0, %s125
      %s126 = sphi 0, %s123
      %s127 = sphi 0, %s126
      %s143 = sphi 0, %s127
      %s149 = sphi 0, %s151
      %s152 = sphi 0, %s149
      %s153 = sphi 0, %s152
      %s169 = sphi 0, %s153
      %s175 = sphi 0, %s177
      %s178 = sphi 0, %s175
      %s179 = sphi 0, %s178
      %s195 = sphi 0, %s179
      %s201 = sphi 0, %s203
      %s204 = sphi 0, %s201
      %s205 = sphi 0, %s204
      %s221 = sphi 0, %s205
      %s227 = sphi 0, %s229
      %s230 = sphi 0, %s227
      %s231 = sphi 0, %s230
      %s247 = sphi 0, %s231
      %s253 = sphi 0, %s255
      %s256 = sphi 0, %s253
      %s257 = sphi 0, %s256
      %s273 = sphi 0, %s257
      %s279 = sphi 0, %s281
      %s282 = sphi 0, %s279
      %s283 = sphi 0, %s282
      %s299 = sphi 0, %s283
      %s305 = sphi 0, %s307
      %s308 = sphi 0, %s305
      %s309 = sphi 0, %s308
      %s325 = sphi 0, %s309
      %s331 = sphi 0, %s333
      %s334 = sphi 0, %s331
      %s335 = sphi 0, %s334
      %s351 = sphi 0, %s335
      %s357 = sphi 0, %s359
      %s360 = sphi 0, %s357
      %s361 = sphi 0, %s360
      %s377 = sphi 0, %s361
      %s383 = sphi 0, %s385
      %s386 = sphi 0, %s383
      %s387 = sphi 0, %s386
      %s403 = sphi 0, %s387
      %s409 = sphi 0, %s411
      %s412 = sphi 0, %s409
      %s413 = sphi 0, %s412
      %s429 = sphi 0, %s413
      %s435 = sphi 0, %s437
      %s438 = sphi 0, %s435
      %s439 = sphi 0, %s438
      %s455 = sphi 0, %s439
    $region4: #{tpu_custom_call.1} parent=1 // loop_header_branch
      %31 = sbr.rel (%p29) target = $region8
    $region5: #{tpu_custom_call.1} parent=1 // loop_body
      %s33 = ssub.s32 %s28, 1
      %s34 = ssub.s32 %s28, 2
      %s41 = sadd.s32 1, %s36
      %p42 = scmp.ge.s32.totalorder %s41, 2
      %s43 = scalar_select %p42, 0, %s41
      %s44 = sadd.s32 1, %s35
      %s45 = scalar_select %p42, %s44, %s35
      %p46 = scmp.ge.s32.totalorder %s45, 2
      %s47 = scalar_select %p46, 0, %s45
      %s48 = ssub.s32 %s35, %s47
      %p49 = scmp.eq.s32.totalorder %s48, 0
      %s51 = sadd.s32 %s50, 1
      %s52 = scalar_select %p49, %s50, %s51
      %p55 = pneg %p49
      %p56 = scmp.eq.s32.totalorder %s28, 3
      %p57 = por %p55, %p56
      %p58 = scmp.ne.s32.totalorder %s50, %s53
      %p59 = scmp.eq.s32.totalorder %s28, 0
      %p60 = por %p58, %p59
      %p61 = scmp.ne.s32.totalorder %s50, %s53
      %p62 = scmp.eq.s32.totalorder %s33, 3
      %p63 = por %p61, %p62
      %p64 = scmp.ne.s32.totalorder %s53, %s54
      %p65 = scmp.eq.s32.totalorder %s33, 0
      %p66 = por %p64, %p65
      %p67 = scmp.ne.s32.totalorder %s53, %s54
      %p68 = scmp.eq.s32.totalorder %s34, 3
      %p69 = por %p67, %p68
      %p71 = scmp.ne.s32.totalorder %s54, %s70
      %p72 = scmp.eq.s32.totalorder %s34, 0
      %p73 = por %p71, %p72
      %s75 = sadd.s32 %s74, 1
      %p78 = scmp.eq.s32.totalorder %s28, 3
      %p79 = scmp.ne.s32.totalorder %s74, %s76
      %p80 = scmp.eq.s32.totalorder %s28, 0
      %p81 = por %p79, %p80
      %p82 = scmp.ne.s32.totalorder %s74, %s76
      %p83 = scmp.eq.s32.totalorder %s33, 3
      %p84 = por %p82, %p83
      %p85 = scmp.ne.s32.totalorder %s76, %s77
      %p86 = scmp.eq.s32.totalorder %s33, 0
      %p87 = por %p85, %p86
      %p88 = scmp.ne.s32.totalorder %s76, %s77
      %p89 = scmp.eq.s32.totalorder %s34, 3
      %p90 = por %p88, %p89
      %p92 = scmp.ne.s32.totalorder %s77, %s91
      %p93 = scmp.eq.s32.totalorder %s34, 0
      %p94 = por %p92, %p93
      %s95 = ssub.s32 %s35, %s47
      %p96 = scmp.eq.s32.totalorder %s95, 0
      %s98 = sadd.s32 %s97, 1
      %s99 = scalar_select %p96, %s97, %s98
      %p102 = pneg %p96
      %p103 = scmp.eq.s32.totalorder %s28, 3
      %p104 = por %p102, %p103
      %p105 = scmp.ne.s32.totalorder %s97, %s100
      %p106 = scmp.eq.s32.totalorder %s28, 0
      %p107 = por %p105, %p106
      %p108 = scmp.ne.s32.totalorder %s97, %s100
      %p109 = scmp.eq.s32.totalorder %s33, 3
      %p110 = por %p108, %p109
      %p111 = scmp.ne.s32.totalorder %s100, %s101
      %p112 = scmp.eq.s32.totalorder %s33, 0
      %p113 = por %p111, %p112
      %p114 = scmp.ne.s32.totalorder %s100, %s101
      %p115 = scmp.eq.s32.totalorder %s34, 3
      %p116 = por %p114, %p115
      %p118 = scmp.ne.s32.totalorder %s101, %s117
      %p119 = scmp.eq.s32.totalorder %s34, 0
      %p120 = por %p118, %p119
      %s121 = ssub.s32 %s36, %s43
      %p122 = scmp.eq.s32.totalorder %s121, 0
      %s124 = sadd.s32 %s123, 1
      %s125 = scalar_select %p122, %s123, %s124
      %p128 = pneg %p122
      %p129 = scmp.eq.s32.totalorder %s28, 3
      %p130 = por %p128, %p129
      %p131 = scmp.ne.s32.totalorder %s123, %s126
      %p132 = scmp.eq.s32.totalorder %s28, 0
      %p133 = por %p131, %p132
      %p134 = scmp.ne.s32.totalorder %s123, %s126
      %p135 = scmp.eq.s32.totalorder %s33, 3
      %p136 = por %p134, %p135
      %p137 = scmp.ne.s32.totalorder %s126, %s127
      %p138 = scmp.eq.s32.totalorder %s33, 0
      %p139 = por %p137, %p138
      %p140 = scmp.ne.s32.totalorder %s126, %s127
      %p141 = scmp.eq.s32.totalorder %s34, 3
      %p142 = por %p140, %p141
      %p144 = scmp.ne.s32.totalorder %s127, %s143
      %p145 = scmp.eq.s32.totalorder %s34, 0
      %p146 = por %p144, %p145
      %s147 = ssub.s32 %s36, %s43
      %p148 = scmp.eq.s32.totalorder %s147, 0
      %s150 = sadd.s32 %s149, 1
      %s151 = scalar_select %p148, %s149, %s150
      %p154 = pneg %p148
      %p155 = scmp.eq.s32.totalorder %s28, 3
      %p156 = por %p154, %p155
      %p157 = scmp.ne.s32.totalorder %s149, %s152
      %p158 = scmp.eq.s32.totalorder %s28, 0
      %p159 = por %p157, %p158
      %p160 = scmp.ne.s32.totalorder %s149, %s152
      %p161 = scmp.eq.s32.totalorder %s33, 3
      %p162 = por %p160, %p161
      %p163 = scmp.ne.s32.totalorder %s152, %s153
      %p164 = scmp.eq.s32.totalorder %s33, 0
      %p165 = por %p163, %p164
      %p166 = scmp.ne.s32.totalorder %s152, %s153
      %p167 = scmp.eq.s32.totalorder %s34, 3
      %p168 = por %p166, %p167
      %p170 = scmp.ne.s32.totalorder %s153, %s169
      %p171 = scmp.eq.s32.totalorder %s34, 0
      %p172 = por %p170, %p171
      %s173 = ssub.s32 %s36, %s43
      %p174 = scmp.eq.s32.totalorder %s173, 0
      %s176 = sadd.s32 %s175, 1
      %s177 = scalar_select %p174, %s175, %s176
      %p180 = pneg %p174
      %p181 = scmp.eq.s32.totalorder %s28, 3
      %p182 = por %p180, %p181
      %p183 = scmp.ne.s32.totalorder %s175, %s178
      %p184 = scmp.eq.s32.totalorder %s28, 0
      %p185 = por %p183, %p184
      %p186 = scmp.ne.s32.totalorder %s175, %s178
      %p187 = scmp.eq.s32.totalorder %s33, 3
      %p188 = por %p186, %p187
      %p189 = scmp.ne.s32.totalorder %s178, %s179
      %p190 = scmp.eq.s32.totalorder %s33, 0
      %p191 = por %p189, %p190
      %p192 = scmp.ne.s32.totalorder %s178, %s179
      %p193 = scmp.eq.s32.totalorder %s34, 3
      %p194 = por %p192, %p193
      %p196 = scmp.ne.s32.totalorder %s179, %s195
      %p197 = scmp.eq.s32.totalorder %s34, 0
      %p198 = por %p196, %p197
      %s199 = ssub.s32 %s36, %s43
      %p200 = scmp.eq.s32.totalorder %s199, 0
      %s202 = sadd.s32 %s201, 1
      %s203 = scalar_select %p200, %s201, %s202
      %p206 = pneg %p200
      %p207 = scmp.eq.s32.totalorder %s28, 3
      %p208 = por %p206, %p207
      %p209 = scmp.ne.s32.totalorder %s201, %s204
      %p210 = scmp.eq.s32.totalorder %s28, 0
      %p211 = por %p209, %p210
      %p212 = scmp.ne.s32.totalorder %s201, %s204
      %p213 = scmp.eq.s32.totalorder %s33, 3
      %p214 = por %p212, %p213
      %p215 = scmp.ne.s32.totalorder %s204, %s205
      %p216 = scmp.eq.s32.totalorder %s33, 0
      %p217 = por %p215, %p216
      %p218 = scmp.ne.s32.totalorder %s204, %s205
      %p219 = scmp.eq.s32.totalorder %s34, 3
      %p220 = por %p218, %p219
      %p222 = scmp.ne.s32.totalorder %s205, %s221
      %p223 = scmp.eq.s32.totalorder %s34, 0
      %p224 = por %p222, %p223
      %s225 = ssub.s32 %s36, %s43
      %p226 = scmp.eq.s32.totalorder %s225, 0
      %s228 = sadd.s32 %s227, 1
      %s229 = scalar_select %p226, %s227, %s228
      %p232 = pneg %p226
      %p233 = scmp.eq.s32.totalorder %s28, 3
      %p234 = por %p232, %p233
      %p235 = scmp.ne.s32.totalorder %s227, %s230
      %p236 = scmp.eq.s32.totalorder %s28, 0
      %p237 = por %p235, %p236
      %p238 = scmp.ne.s32.totalorder %s227, %s230
      %p239 = scmp.eq.s32.totalorder %s33, 3
      %p240 = por %p238, %p239
      %p241 = scmp.ne.s32.totalorder %s230, %s231
      %p242 = scmp.eq.s32.totalorder %s33, 0
      %p243 = por %p241, %p242
      %p244 = scmp.ne.s32.totalorder %s230, %s231
      %p245 = scmp.eq.s32.totalorder %s34, 3
      %p246 = por %p244, %p245
      %p248 = scmp.ne.s32.totalorder %s231, %s247
      %p249 = scmp.eq.s32.totalorder %s34, 0
      %p250 = por %p248, %p249
      %s251 = ssub.s32 %s36, %s43
      %p252 = scmp.eq.s32.totalorder %s251, 0
      %s254 = sadd.s32 %s253, 1
      %s255 = scalar_select %p252, %s253, %s254
      %p258 = pneg %p252
      %p259 = scmp.eq.s32.totalorder %s28, 3
      %p260 = por %p258, %p259
      %p261 = scmp.ne.s32.totalorder %s253, %s256
      %p262 = scmp.eq.s32.totalorder %s28, 0
      %p263 = por %p261, %p262
      %p264 = scmp.ne.s32.totalorder %s253, %s256
      %p265 = scmp.eq.s32.totalorder %s33, 3
      %p266 = por %p264, %p265
      %p267 = scmp.ne.s32.totalorder %s256, %s257
      %p268 = scmp.eq.s32.totalorder %s33, 0
      %p269 = por %p267, %p268
      %p270 = scmp.ne.s32.totalorder %s256, %s257
      %p271 = scmp.eq.s32.totalorder %s34, 3
      %p272 = por %p270, %p271
      %p274 = scmp.ne.s32.totalorder %s257, %s273
      %p275 = scmp.eq.s32.totalorder %s34, 0
      %p276 = por %p274, %p275
      %s277 = ssub.s32 %s36, %s43
      %p278 = scmp.eq.s32.totalorder %s277, 0
      %s280 = sadd.s32 %s279, 1
      %s281 = scalar_select %p278, %s279, %s280
      %p284 = pneg %p278
      %p285 = scmp.eq.s32.totalorder %s28, 3
      %p286 = por %p284, %p285
      %p287 = scmp.ne.s32.totalorder %s279, %s282
      %p288 = scmp.eq.s32.totalorder %s28, 0
      %p289 = por %p287, %p288
      %p290 = scmp.ne.s32.totalorder %s279, %s282
      %p291 = scmp.eq.s32.totalorder %s33, 3
      %p292 = por %p290, %p291
      %p293 = scmp.ne.s32.totalorder %s282, %s283
      %p294 = scmp.eq.s32.totalorder %s33, 0
      %p295 = por %p293, %p294
      %p296 = scmp.ne.s32.totalorder %s282, %s283
      %p297 = scmp.eq.s32.totalorder %s34, 3
      %p298 = por %p296, %p297
      %p300 = scmp.ne.s32.totalorder %s283, %s299
      %p301 = scmp.eq.s32.totalorder %s34, 0
      %p302 = por %p300, %p301
      %s303 = ssub.s32 %s36, %s43
      %p304 = scmp.eq.s32.totalorder %s303, 0
      %s306 = sadd.s32 %s305, 1
      %s307 = scalar_select %p304, %s305, %s306
      %p310 = pneg %p304
      %p311 = scmp.eq.s32.totalorder %s28, 3
      %p312 = por %p310, %p311
      %p313 = scmp.ne.s32.totalorder %s305, %s308
      %p314 = scmp.eq.s32.totalorder %s28, 0
      %p315 = por %p313, %p314
      %p316 = scmp.ne.s32.totalorder %s305, %s308
      %p317 = scmp.eq.s32.totalorder %s33, 3
      %p318 = por %p316, %p317
      %p319 = scmp.ne.s32.totalorder %s308, %s309
      %p320 = scmp.eq.s32.totalorder %s33, 0
      %p321 = por %p319, %p320
      %p322 = scmp.ne.s32.totalorder %s308, %s309
      %p323 = scmp.eq.s32.totalorder %s34, 3
      %p324 = por %p322, %p323
      %p326 = scmp.ne.s32.totalorder %s309, %s325
      %p327 = scmp.eq.s32.totalorder %s34, 0
      %p328 = por %p326, %p327
      %s329 = ssub.s32 %s36, %s43
      %p330 = scmp.eq.s32.totalorder %s329, 0
      %s332 = sadd.s32 %s331, 1
      %s333 = scalar_select %p330, %s331, %s332
      %p336 = pneg %p330
      %p337 = scmp.eq.s32.totalorder %s28, 3
      %p338 = por %p336, %p337
      %p339 = scmp.ne.s32.totalorder %s331, %s334
      %p340 = scmp.eq.s32.totalorder %s28, 0
      %p341 = por %p339, %p340
      %p342 = scmp.ne.s32.totalorder %s331, %s334
      %p343 = scmp.eq.s32.totalorder %s33, 3
      %p344 = por %p342, %p343
      %p345 = scmp.ne.s32.totalorder %s334, %s335
      %p346 = scmp.eq.s32.totalorder %s33, 0
      %p347 = por %p345, %p346
      %p348 = scmp.ne.s32.totalorder %s334, %s335
      %p349 = scmp.eq.s32.totalorder %s34, 3
      %p350 = por %p348, %p349
      %p352 = scmp.ne.s32.totalorder %s335, %s351
      %p353 = scmp.eq.s32.totalorder %s34, 0
      %p354 = por %p352, %p353
      %s355 = ssub.s32 %s36, %s43
      %p356 = scmp.eq.s32.totalorder %s355, 0
      %s358 = sadd.s32 %s357, 1
      %s359 = scalar_select %p356, %s357, %s358
      %p362 = pneg %p356
      %p363 = scmp.eq.s32.totalorder %s28, 3
      %p364 = por %p362, %p363
      %p365 = scmp.ne.s32.totalorder %s357, %s360
      %p366 = scmp.eq.s32.totalorder %s28, 0
      %p367 = por %p365, %p366
      %p368 = scmp.ne.s32.totalorder %s357, %s360
      %p369 = scmp.eq.s32.totalorder %s33, 3
      %p370 = por %p368, %p369
      %p371 = scmp.ne.s32.totalorder %s360, %s361
      %p372 = scmp.eq.s32.totalorder %s33, 0
      %p373 = por %p371, %p372
      %p374 = scmp.ne.s32.totalorder %s360, %s361
      %p375 = scmp.eq.s32.totalorder %s34, 3
      %p376 = por %p374, %p375
      %p378 = scmp.ne.s32.totalorder %s361, %s377
      %p379 = scmp.eq.s32.totalorder %s34, 0
      %p380 = por %p378, %p379
      %s381 = ssub.s32 %s36, %s43
      %p382 = scmp.eq.s32.totalorder %s381, 0
      %s384 = sadd.s32 %s383, 1
      %s385 = scalar_select %p382, %s383, %s384
      %p388 = pneg %p382
      %p389 = scmp.eq.s32.totalorder %s28, 3
      %p390 = por %p388, %p389
      %p391 = scmp.ne.s32.totalorder %s383, %s386
      %p392 = scmp.eq.s32.totalorder %s28, 0
      %p393 = por %p391, %p392
      %p394 = scmp.ne.s32.totalorder %s383, %s386
      %p395 = scmp.eq.s32.totalorder %s33, 3
      %p396 = por %p394, %p395
      %p397 = scmp.ne.s32.totalorder %s386, %s387
      %p398 = scmp.eq.s32.totalorder %s33, 0
      %p399 = por %p397, %p398
      %p400 = scmp.ne.s32.totalorder %s386, %s387
      %p401 = scmp.eq.s32.totalorder %s34, 3
      %p402 = por %p400, %p401
      %p404 = scmp.ne.s32.totalorder %s387, %s403
      %p405 = scmp.eq.s32.totalorder %s34, 0
      %p406 = por %p404, %p405
      %s407 = ssub.s32 %s36, %s43
      %p408 = scmp.eq.s32.totalorder %s407, 0
      %s410 = sadd.s32 %s409, 1
      %s411 = scalar_select %p408, %s409, %s410
      %p414 = pneg %p408
      %p415 = scmp.eq.s32.totalorder %s28, 3
      %p416 = por %p414, %p415
      %p417 = scmp.ne.s32.totalorder %s409, %s412
      %p418 = scmp.eq.s32.totalorder %s28, 0
      %p419 = por %p417, %p418
      %p420 = scmp.ne.s32.totalorder %s409, %s412
      %p421 = scmp.eq.s32.totalorder %s33, 3
      %p422 = por %p420, %p421
      %p423 = scmp.ne.s32.totalorder %s412, %s413
      %p424 = scmp.eq.s32.totalorder %s33, 0
      %p425 = por %p423, %p424
      %p426 = scmp.ne.s32.totalorder %s412, %s413
      %p427 = scmp.eq.s32.totalorder %s34, 3
      %p428 = por %p426, %p427
      %p430 = scmp.ne.s32.totalorder %s413, %s429
      %p431 = scmp.eq.s32.totalorder %s34, 0
      %p432 = por %p430, %p431
      %s433 = ssub.s32 %s35, %s47
      %p434 = scmp.eq.s32.totalorder %s433, 0
      %s436 = sadd.s32 %s435, 1
      %s437 = scalar_select %p434, %s435, %s436
      %p440 = pneg %p434
      %p441 = scmp.eq.s32.totalorder %s28, 3
      %p442 = por %p440, %p441
      %p443 = scmp.ne.s32.totalorder %s435, %s438
      %p444 = scmp.eq.s32.totalorder %s28, 0
      %p445 = por %p443, %p444
      %p446 = scmp.ne.s32.totalorder %s435, %s438
      %p447 = scmp.eq.s32.totalorder %s33, 3
      %p448 = por %p446, %p447
      %p449 = scmp.ne.s32.totalorder %s438, %s439
      %p450 = scmp.eq.s32.totalorder %s33, 0
      %p451 = por %p449, %p450
      %p452 = scmp.ne.s32.totalorder %s438, %s439
      %p453 = scmp.eq.s32.totalorder %s34, 3
      %p454 = por %p452, %p453
      %p456 = scmp.ne.s32.totalorder %s439, %s455
      %p457 = scmp.eq.s32.totalorder %s34, 0
      %p458 = por %p456, %p457
      %p459 = scmp.le.s32.totalorder 1, %s28
      %p460 = scmp.lt.s32.totalorder %s28, 5
      %p461 = pnand %p459, %p460
      %p462 = pneg %p461
      // Predicated region
      $region9: #{tpu_custom_call.1} parent=5 // pred_check
        _
      $region10: #{tpu_custom_call.1} parent=5 // pred_check_branch
        %464 = sbr.rel (%p461) target = $region12
      $region11: #{tpu_custom_call.1} parent=5 // pred_region
        %s465 = ssub.s32 %s28, 1
        // Predicated region
        $region13: #{tpu_custom_call.1} parent=11 // pred_check
          %p466 = pneg %p87
        $region14: #{tpu_custom_call.1} parent=11 // pred_check_branch
          %468 = sbr.rel (%p466) target = $region16
        $region15: #{tpu_custom_call.1} parent=11 // pred_region
          %s470 = ssub.s32 128, 128
          %471 = vsyncadd [#allocation8], %s470
          %s473 = sshll.u32 [#allocation7], 4
          %s474 = int_to_ptr.vmem [resolvable:$true] %s473
          %476 = dma.hbm_to_vmem [thread:$0]  %s1, 128, %s474, [#allocation8]
        $region16: #{tpu_custom_call.1} parent=11 // pred_fallthru
          _
      $region12: #{tpu_custom_call.1} parent=5 // pred_fallthru
        _
      %p477 = scmp.lt.s32.totalorder %s28, 4
      // Predicated region
      $region17: #{tpu_custom_call.1} parent=5 // pred_check
        %p478 = pneg %p477
      $region18: #{tpu_custom_call.1} parent=5 // pred_check_branch
        %480 = sbr.rel (%p478) target = $region20
      $region19: #{tpu_custom_call.1} parent=5 // pred_region
        // Predicated region
        $region21: #{tpu_custom_call.1} parent=19 // pred_check
          %p481 = pneg %p60
        $region22: #{tpu_custom_call.1} parent=19 // pred_check_branch
          %483 = sbr.rel (%p481) target = $region24
        $region23: #{tpu_custom_call.1} parent=19 // pred_region
          %s484 = sand.u32 %s50, 1
          %s485 = scalar_lea.sflag [#allocation5], %s484
          %s486 = sand.u32 %s50, 1
          %s487 = smul.addr %s486, 4
          %s488 = scalar_lea.vmem [#allocation4], %s487
          %s490 = ssub.s32 64, 64
          %491 = vsyncadd %s485, %s490
          %s492 = smul.addr %s35, 64
          %s493 = scalar_lea.hbm %s0, %s492
          %s495 = sshll.u32 %s488, 4
          %s496 = int_to_ptr.vmem [resolvable:$true] %s495
          %498 = dma.hbm_to_vmem [thread:$0]  %s493, 64, %s496, %s485
        $region24: #{tpu_custom_call.1} parent=19 // pred_fallthru
          _
        // Predicated region
        $region25: #{tpu_custom_call.1} parent=19 // pred_check
          %p499 = pneg %p107
        $region26: #{tpu_custom_call.1} parent=19 // pred_check_branch
          %501 = sbr.rel (%p499) target = $region28
        $region27: #{tpu_custom_call.1} parent=19 // pred_region
          %p502 = scmp.lt.s32.totalorder %s35, 1
          %s503 = scalar_select %p502, %s35, 1
          %s504 = scalar_lea.vmem %s2, %s503
        $region28: #{tpu_custom_call.1} parent=19 // pred_fallthru
          _
        // Predicated region
        $region29: #{tpu_custom_call.1} parent=19 // pred_check
          %p505 = pneg %p133
        $region30: #{tpu_custom_call.1} parent=19 // pred_check_branch
          %507 = sbr.rel (%p505) target = $region32
        $region31: #{tpu_custom_call.1} parent=19 // pred_region
          %p508 = scmp.lt.s32.totalorder %s36, 1
          %s509 = scalar_select %p508, %s36, 1
          %s510 = smul.addr %s509, 4
          %s511 = smul.addr %s510, 4
          %s512 = scalar_lea.vmem %s3, %s511
        $region32: #{tpu_custom_call.1} parent=19 // pred_fallthru
          _
        // Predicated region
        $region33: #{tpu_custom_call.1} parent=19 // pred_check
          %p513 = pneg %p159
        $region34: #{tpu_custom_call.1} parent=19 // pred_check_branch
          %515 = sbr.rel (%p513) target = $region36
        $region35: #{tpu_custom_call.1} parent=19 // pred_region
          %p516 = scmp.lt.s32.totalorder %s36, 1
          %s517 = scalar_select %p516, %s36, 1
          %s518 = scalar_lea.vmem %s4, %s517
        $region36: #{tpu_custom_call.1} parent=19 // pred_fallthru
          _
        // Predicated region
        $region37: #{tpu_custom_call.1} parent=19 // pred_check
          %p519 = pneg %p185
        $region38: #{tpu_custom_call.1} parent=19 // pred_check_branch
          %521 = sbr.rel (%p519) target = $region40
        $region39: #{tpu_custom_call.1} parent=19 // pred_region
          %p522 = scmp.lt.s32.totalorder %s36, 1
          %s523 = scalar_select %p522, %s36, 1
          %s524 = smul.addr %s523, 4
          %s525 = smul.addr %s524, 4
          %s526 = scalar_lea.vmem %s5, %s525
        $region40: #{tpu_custom_call.1} parent=19 // pred_fallthru
          _
        // Predicated region
        $region41: #{tpu_custom_call.1} parent=19 // pred_check
          %p527 = pneg %p211
        $region42: #{tpu_custom_call.1} parent=19 // pred_check_branch
          %529 = sbr.rel (%p527) target = $region44
        $region43: #{tpu_custom_call.1} parent=19 // pred_region
          %p530 = scmp.lt.s32.totalorder %s36, 1
          %s531 = scalar_select %p530, %s36, 1
          %s532 = scalar_lea.vmem %s6, %s531
        $region44: #{tpu_custom_call.1} parent=19 // pred_fallthru
          _
        // Predicated region
        $region45: #{tpu_custom_call.1} parent=19 // pred_check
          %p533 = pneg %p237
        $region46: #{tpu_custom_call.1} parent=19 // pred_check_branch
          %535 = sbr.rel (%p533) target = $region48
        $region47: #{tpu_custom_call.1} parent=19 // pred_region
          %p536 = scmp.lt.s32.totalorder %s36, 1
          %s537 = scalar_select %p536, %s36, 1
          %s538 = scalar_lea.vmem %s7, %s537
        $region48: #{tpu_custom_call.1} parent=19 // pred_fallthru
          _
        // Predicated region
        $region49: #{tpu_custom_call.1} parent=19 // pred_check
          %p539 = pneg %p263
        $region50: #{tpu_custom_call.1} parent=19 // pred_check_branch
          %541 = sbr.rel (%p539) target = $region52
        $region51: #{tpu_custom_call.1} parent=19 // pred_region
          %p542 = scmp.lt.s32.totalorder %s36, 1
          %s543 = scalar_select %p542, %s36, 1
          %s544 = scalar_lea.vmem %s8, %s543
        $region52: #{tpu_custom_call.1} parent=19 // pred_fallthru
          _
        // Predicated region
        $region53: #{tpu_custom_call.1} parent=19 // pred_check
          %p545 = pneg %p289
        $region54: #{tpu_custom_call.1} parent=19 // pred_check_branch
          %547 = sbr.rel (%p545) target = $region56
        $region55: #{tpu_custom_call.1} parent=19 // pred_region
          %p548 = scmp.lt.s32.totalorder %s36, 1
          %s549 = scalar_select %p548, %s36, 1
          %s550 = scalar_lea.vmem %s9, %s549
        $region56: #{tpu_custom_call.1} parent=19 // pred_fallthru
          _
        // Predicated region
        $region57: #{tpu_custom_call.1} parent=19 // pred_check
          %p551 = pneg %p315
        $region58: #{tpu_custom_call.1} parent=19 // pred_check_branch
          %553 = sbr.rel (%p551) target = $region60
        $region59: #{tpu_custom_call.1} parent=19 // pred_region
          %p554 = scmp.lt.s32.totalorder %s36, 1
          %s555 = scalar_select %p554, %s36, 1
          %s556 = scalar_lea.vmem %s10, %s555
        $region60: #{tpu_custom_call.1} parent=19 // pred_fallthru
          _
        // Predicated region
        $region61: #{tpu_custom_call.1} parent=19 // pred_check
          %p557 = pneg %p341
        $region62: #{tpu_custom_call.1} parent=19 // pred_check_branch
          %559 = sbr.rel (%p557) target = $region64
        $region63: #{tpu_custom_call.1} parent=19 // pred_region
          %p560 = scmp.lt.s32.totalorder %s36, 1
          %s561 = scalar_select %p560, %s36, 1
          %s562 = smul.addr %s561, 4
          %s563 = smul.addr %s562, 4
          %s564 = scalar_lea.vmem %s11, %s563
        $region64: #{tpu_custom_call.1} parent=19 // pred_fallthru
          _
        // Predicated region
        $region65: #{tpu_custom_call.1} parent=19 // pred_check
          %p565 = pneg %p367
        $region66: #{tpu_custom_call.1} parent=19 // pred_check_branch
          %567 = sbr.rel (%p565) target = $region68
        $region67: #{tpu_custom_call.1} parent=19 // pred_region
          %p568 = scmp.lt.s32.totalorder %s36, 1
          %s569 = scalar_select %p568, %s36, 1
          %s570 = scalar_lea.vmem %s12, %s569
        $region68: #{tpu_custom_call.1} parent=19 // pred_fallthru
          _
        // Predicated region
        $region69: #{tpu_custom_call.1} parent=19 // pred_check
          %p571 = pneg %p393
        $region70: #{tpu_custom_call.1} parent=19 // pred_check_branch
          %573 = sbr.rel (%p571) target = $region72
        $region71: #{tpu_custom_call.1} parent=19 // pred_region
          %p574 = scmp.lt.s32.totalorder %s36, 1
          %s575 = scalar_select %p574, %s36, 1
          %s576 = smul.addr %s575, 8
          %s577 = smul.addr %s576, 4
          %s578 = scalar_lea.vmem %s13, %s577
        $region72: #{tpu_custom_call.1} parent=19 // pred_fallthru
          _
        // Predicated region
        $region73: #{tpu_custom_call.1} parent=19 // pred_check
          %p579 = pneg %p419
        $region74: #{tpu_custom_call.1} parent=19 // pred_check_branch
          %581 = sbr.rel (%p579) target = $region76
        $region75: #{tpu_custom_call.1} parent=19 // pred_region
          %p582 = scmp.lt.s32.totalorder %s36, 1
          %s583 = scalar_select %p582, %s36, 1
          %s584 = scalar_lea.vmem %s14, %s583
        $region76: #{tpu_custom_call.1} parent=19 // pred_fallthru
          _
      $region20: #{tpu_custom_call.1} parent=5 // pred_fallthru
        _
      %p585 = scmp.le.s32.totalorder 1, %s28
      %p586 = scmp.lt.s32.totalorder %s28, 5
      %p587 = pnand %p585, %p586
      %p588 = pneg %p587
      // Predicated region
      $region77: #{tpu_custom_call.1} parent=5 // pred_check
        _
      $region78: #{tpu_custom_call.1} parent=5 // pred_check_branch
        %590 = sbr.rel (%p587) target = $region80
      $region79: #{tpu_custom_call.1} parent=5 // pred_region
        %s591 = ssub.s32 %s28, 1
        %s592 = sand.u32 %s53, 1
        %s593 = scalar_lea.sflag [#allocation5], %s592
        %s594 = sand.u32 %s53, 1
        %s595 = smul.addr %s594, 4
        %s596 = scalar_lea.vmem [#allocation4], %s595
        // Predicated region
        $region81: #{tpu_custom_call.1} parent=79 // pred_check
          %p597 = pneg %p66
        $region82: #{tpu_custom_call.1} parent=79 // pred_check_branch
          %599 = sbr.rel (%p597) target = $region84
        $region83: #{tpu_custom_call.1} parent=79 // pred_region
          %600 = dma.done %s593, 64
        $region84: #{tpu_custom_call.1} parent=79 // pred_fallthru
          _
        // Predicated region
        $region85: #{tpu_custom_call.1} parent=79 // pred_check
          %p601 = pneg %p87
        $region86: #{tpu_custom_call.1} parent=79 // pred_check_branch
          %603 = sbr.rel (%p601) target = $region88
        $region87: #{tpu_custom_call.1} parent=79 // pred_region
          %604 = dma.done [#allocation8], 128
        $region88: #{tpu_custom_call.1} parent=79 // pred_fallthru
          _
        %s605 = sand.u32 %s53, 1
        %s606 = scalar_lea.sflag [#allocation5], %s605
        %s607 = sand.u32 %s53, 1
        %s608 = smul.addr %s607, 4
        %s609 = scalar_lea.vmem [#allocation4], %s608
        %p610 = pneg %p66
        %p611 = pneg %p63
        %p612 = pneg %p87
        %p613 = pneg %p84
        %p614 = scmp.lt.s32.totalorder %s37, 1
        %s615 = scalar_select %p614, %s37, 1
        %s616 = scalar_lea.vmem %s2, %s615
        %p617 = pneg %p113
        %p618 = pneg %p110
        %p619 = scmp.lt.s32.totalorder %s38, 1
        %s620 = scalar_select %p619, %s38, 1
        %s621 = smul.addr %s620, 4
        %s622 = smul.addr %s621, 4
        %s623 = scalar_lea.vmem %s3, %s622
        %p624 = pneg %p139
        %p625 = pneg %p136
        %p626 = scmp.lt.s32.totalorder %s38, 1
        %s627 = scalar_select %p626, %s38, 1
        %s628 = scalar_lea.vmem %s4, %s627
        %p629 = pneg %p165
        %p630 = pneg %p162
        %p631 = scmp.lt.s32.totalorder %s38, 1
        %s632 = scalar_select %p631, %s38, 1
        %s633 = smul.addr %s632, 4
        %s634 = smul.addr %s633, 4
        %s635 = scalar_lea.vmem %s5, %s634
        %p636 = pneg %p191
        %p637 = pneg %p188
        %p638 = scmp.lt.s32.totalorder %s38, 1
        %s639 = scalar_select %p638, %s38, 1
        %s640 = scalar_lea.vmem %s6, %s639
        %p641 = pneg %p217
        %p642 = pneg %p214
        %p643 = scmp.lt.s32.totalorder %s38, 1
        %s644 = scalar_select %p643, %s38, 1
        %s645 = scalar_lea.vmem %s7, %s644
        %p646 = pneg %p243
        %p647 = pneg %p240
        %p648 = scmp.lt.s32.totalorder %s38, 1
        %s649 = scalar_select %p648, %s38, 1
        %s650 = scalar_lea.vmem %s8, %s649
        %p651 = pneg %p269
        %p652 = pneg %p266
        %p653 = scmp.lt.s32.totalorder %s38, 1
        %s654 = scalar_select %p653, %s38, 1
        %s655 = scalar_lea.vmem %s9, %s654
        %p656 = pneg %p295
        %p657 = pneg %p292
        %p658 = scmp.lt.s32.totalorder %s38, 1
        %s659 = scalar_select %p658, %s38, 1
        %s660 = scalar_lea.vmem %s10, %s659
        %p661 = pneg %p321
        %p662 = pneg %p318
        %p663 = scmp.lt.s32.totalorder %s38, 1
        %s664 = scalar_select %p663, %s38, 1
        %s665 = smul.addr %s664, 4
        %s666 = smul.addr %s665, 4
        %s667 = scalar_lea.vmem %s11, %s666
        %p668 = pneg %p347
        %p669 = pneg %p344
        %p670 = scmp.lt.s32.totalorder %s38, 1
        %s671 = scalar_select %p670, %s38, 1
        %s672 = scalar_lea.vmem %s12, %s671
        %p673 = pneg %p373
        %p674 = pneg %p370
        %p675 = scmp.lt.s32.totalorder %s38, 1
        %s676 = scalar_select %p675, %s38, 1
        %s677 = smul.addr %s676, 8
        %s678 = smul.addr %s677, 4
        %s679 = scalar_lea.vmem %s13, %s678
        %p680 = pneg %p399
        %p681 = pneg %p396
        %p682 = scmp.lt.s32.totalorder %s38, 1
        %s683 = scalar_select %p682, %s38, 1
        %s684 = scalar_lea.vmem %s14, %s683
        %p685 = pneg %p425
        %p686 = pneg %p422
        %p687 = pneg %p451
        %p688 = pneg %p448
        %s689 = sand.u32 %s438, 1
        %s690 = scalar_lea.sflag [#allocation6], %s689
        %s691 = sand.u32 %s438, 1
        %s692 = smul.addr %s691, 8
        %s693 = scalar_lea.vmem [#allocation9], %s692
        %p694 = scmp.lt.s32.totalorder %s37, 1
        %s695 = scalar_select %p694, %s37, 1
        %s696 = scalar_lea.vmem %s2, %s695
        %p697 = scmp.lt.s32.totalorder %s38, 1
        %s698 = scalar_select %p697, %s38, 1
        %s699 = smul.addr %s698, 4
        %s700 = smul.addr %s699, 4
        %s701 = scalar_lea.vmem %s3, %s700
        %p702 = scmp.lt.s32.totalorder %s38, 1
        %s703 = scalar_select %p702, %s38, 1
        %s704 = scalar_lea.vmem %s4, %s703
        %p705 = scmp.lt.s32.totalorder %s38, 1
        %s706 = scalar_select %p705, %s38, 1
        %s707 = smul.addr %s706, 4
        %s708 = smul.addr %s707, 4
        %s709 = scalar_lea.vmem %s5, %s708
        %p710 = scmp.lt.s32.totalorder %s38, 1
        %s711 = scalar_select %p710, %s38, 1
        %s712 = scalar_lea.vmem %s6, %s711
        %p713 = scmp.lt.s32.totalorder %s38, 1
        %s714 = scalar_select %p713, %s38, 1
        %s715 = scalar_lea.vmem %s7, %s714
        %p716 = scmp.lt.s32.totalorder %s38, 1
        %s717 = scalar_select %p716, %s38, 1
        %s718 = scalar_lea.vmem %s8, %s717
        %p719 = scmp.lt.s32.totalorder %s38, 1
        %s720 = scalar_select %p719, %s38, 1
        %s721 = scalar_lea.vmem %s9, %s720
        %p722 = scmp.lt.s32.totalorder %s38, 1
        %s723 = scalar_select %p722, %s38, 1
        %s724 = scalar_lea.vmem %s10, %s723
        %p725 = scmp.lt.s32.totalorder %s38, 1
        %s726 = scalar_select %p725, %s38, 1
        %s727 = smul.addr %s726, 4
        %s728 = smul.addr %s727, 4
        %s729 = scalar_lea.vmem %s11, %s728
        %p730 = scmp.lt.s32.totalorder %s38, 1
        %s731 = scalar_select %p730, %s38, 1
        %s732 = scalar_lea.vmem %s12, %s731
        %p733 = scmp.lt.s32.totalorder %s38, 1
        %s734 = scalar_select %p733, %s38, 1
        %s735 = smul.addr %s734, 8
        %s736 = smul.addr %s735, 4
        %s737 = scalar_lea.vmem %s13, %s736
        %p738 = scmp.lt.s32.totalorder %s38, 1
        %s739 = scalar_select %p738, %s38, 1
        %s740 = scalar_lea.vmem %s14, %s739
        %p742 = scmp.eq.s32.totalorder %s38, 0
        // Predicated region
        $region89: #{tpu_custom_call.1} parent=79 // pred_check
          %p743 = pneg %p742
        $region90: #{tpu_custom_call.1} parent=79 // pred_check_branch
          %745 = sbr.rel (%p743) target = $region92
        $region91: #{tpu_custom_call.1} parent=79 // pred_region
          %v746 = vld [vmem:[%s596] sm:$0xf]
          %v747 = vunpack.c.l.bf16 %v746
          %v748 = vmul.f32 %v747, 5.656854
          %v749 = vld [vmem:[#allocation7] sm:$0xff]
          %v750 = vadd.f32 %v748, %v749
          %vm751 = vcmask 261120
          %752 = vst.msk [vmem:[#allocation2] sm:$0xff] %vm751, %v750
        $region92: #{tpu_custom_call.1} parent=79 // pred_fallthru
          _
        %v753 = vld [vmem:[#allocation2] sm:$0xff]
        %v754 = vld [vmem:[%s696] sm:$0x1]
        %v755 = vpack.c.bf16 %v753, %v753
        %v756 = vld [vmem:[%s701] sm:$0xf]
        %v757 = vld [vmem:[%s701 + $0x4] sm:$0xf]
        %v758 = vld [vmem:[%s701 + $0x8] sm:$0xf]
        %v759 = vld [vmem:[%s701 + $0xc] sm:$0xf]
        %v760 = vld [vmem:[%s704] sm:$0x1]
        %v762 = vlaneseq
        %v763 = vshrl.u32 %v762, 7
        %v764 = vsub.s32 0, %v763
        %v765 = vrot.slane %v760, %v764
        %v771 = vunpack.c.l.b16 %v756
        %v772 = vunpack.c.l.b16 %v757
        %v773 = vunpack.c.l.b16 %v758
        %v774 = vunpack.c.l.b16 %v759
        %v775 = vpack.c.b16 %v772, %v771
        %v776 = vpack.c.b16 %v774, %v773
        %vm779 = vcmask 261120
        %v781 = vsel %vm779, %v755, 0
        %783 = vmatprep.subr.bf16.mxu0 0
        %784 = vmatpush1.bf16.msra.mxu0 %v775
        %785 = vmatprep.subr.bf16.mxu0 0
        %786 = vmatpush1.bf16.msra.mxu0 %v776
        %787 = vmatprep.subr.bf16.mxu0 0
        %788 = vmatpush1.bf16.msra.mxu0 0
        %789 = vmatprep.subr.bf16.mxu0 0
        %790 = vmatpush1.bf16.msra.mxu0 0
        %791 = vmatprep.subr.bf16.mxu0 0
        %792 = vmatpush1.bf16.msra.mxu0 0
        %793 = vmatprep.subr.bf16.mxu0 0
        %794 = vmatpush1.bf16.msra.mxu0 0
        %795 = vmatprep.subr.bf16.mxu0 0
        %796 = vmatpush1.bf16.msra.mxu0 0
        %797 = vmatprep.subr.bf16.mxu0 0
        %798 = vmatpush1.bf16.msra.mxu0 0
        %799 = vmatprep.subr.bf16.mxu0 0
        %800 = vmatpush1.bf16.msra.mxu0 0
        %801 = vmatprep.subr.bf16.mxu0 0
        %802 = vmatpush1.bf16.msra.mxu0 0
        %803 = vmatprep.subr.bf16.mxu0 0
        %804 = vmatpush1.bf16.msra.mxu0 0
        %805 = vmatprep.subr.bf16.mxu0 0
        %806 = vmatpush1.bf16.msra.mxu0 0
        %807 = vmatprep.subr.bf16.mxu0 0
        %808 = vmatpush1.bf16.msra.mxu0 0
        %809 = vmatprep.subr.bf16.mxu0 0
        %810 = vmatpush1.bf16.msra.mxu0 0
        %811 = vmatprep.subr.bf16.mxu0 0
        %812 = vmatpush1.bf16.msra.mxu0 0
        %813 = vmatprep.subr.bf16.mxu0 0
        %814 = vmatpush1.bf16.msra.mxu0 0
        %815 = vmatprep.mubr.bf16.mxu0 0
        %816 = vmatmul.mubr.bf16.gmra.mrb[0].mxu0 %v781
        %v817 = vpop.f32.mrb[0].mxu0
        %v818 = vadd.f32 %v765, %v817
        %v819 = vpop.f32.mrb[0].mxu0
        %v820 = vpop.f32.mrb[0].mxu0
        %v821 = vpop.f32.mrb[0].mxu0
        %822 = vdwg.mxu0
        %v823 = vpack.c.bf16 %v818, %v818
        %v825 = vlaneseq
        %v826 = vshrl.u32 %v825, 7
        %v827 = vsub.s32 0, %v826
        %v828 = vrot.slane %v754, %v827
        %831 = vrot.lane.b32.xlu0 %v823, 96
        %v832 = vpop.permute.xlu0 %831
        %vm833 = vcmask 64512
        %v835 = vsel %vm833, %v823, 0
        %v838 = vsel %vm833, %v832, 0
        %840 = vmatprep.subr.bf16.mxu0 0
        %841 = vmatpush1.bf16.xpose.msra.mxu0 %v838
        %842 = vmatprep.subr.bf16.mxu0 0
        %843 = vmatpush1.bf16.xpose.msra.mxu0 0
        %844 = vmatprep.subr.bf16.mxu0 0
        %845 = vmatpush1.bf16.xpose.msra.mxu0 0
        %846 = vmatprep.subr.bf16.mxu0 0
        %847 = vmatpush1.bf16.xpose.msra.mxu0 0
        %848 = vmatprep.subr.bf16.mxu0 0
        %849 = vmatpush1.bf16.xpose.msra.mxu0 0
        %850 = vmatprep.subr.bf16.mxu0 0
        %851 = vmatpush1.bf16.xpose.msra.mxu0 0
        %852 = vmatprep.subr.bf16.mxu0 0
        %853 = vmatpush1.bf16.xpose.msra.mxu0 0
        %854 = vmatprep.subr.bf16.mxu0 0
        %855 = vmatpush1.bf16.xpose.msra.mxu0 0
        %856 = vmatprep.subr.bf16.mxu0 0
        %857 = vmatpush1.bf16.xpose.msra.mxu0 0
        %858 = vmatprep.subr.bf16.mxu0 0
        %859 = vmatpush1.bf16.xpose.msra.mxu0 0
        %860 = vmatprep.subr.bf16.mxu0 0
        %861 = vmatpush1.bf16.xpose.msra.mxu0 0
        %862 = vmatprep.subr.bf16.mxu0 0
        %863 = vmatpush1.bf16.xpose.msra.mxu0 0
        %864 = vmatprep.subr.bf16.mxu0 0
        %865 = vmatpush1.bf16.xpose.msra.mxu0 0
        %866 = vmatprep.subr.bf16.mxu0 0
        %867 = vmatpush1.bf16.xpose.msra.mxu0 0
        %868 = vmatprep.subr.bf16.mxu0 0
        %869 = vmatpush1.bf16.xpose.msra.mxu0 0
        %870 = vmatprep.subr.bf16.mxu0 0
        %871 = vmatpush1.bf16.xpose.msra.mxu0 0
        %872 = vmatprep.mubr.bf16.mxu0 0
        %873 = vmatmul.mubr.bf16.gmra.mrb[0].mxu0 %v835
        %v874 = vpop.f32.mrb[0].mxu0
        %v875 = vadd.f32 %v828, %v874
        %v876 = vpop.f32.mrb[0].mxu0
        %v877 = vpop.f32.mrb[0].mxu0
        %v878 = vpop.f32.mrb[0].mxu0
        %879 = vdwg.mxu0
        %v880 = vsel %vm833, %v875, -inf
        %881 = vmax.xlane.f32.xlu0 %v880
        %v882 = vpop.xlane.xlu0 %881
        %v883 = vsub.f32 %v875, %v882
        %v884 = vmul.f32 %v883, 1.442695
        %v885 = vpow.pop %v884
        %v886 = vsel %vm833, %v885, 0.0
        %887 = vadd.xlane.f32.xlu0 %v886
        %v888 = vpop.xlane.xlu0 %887
        %v889 = vrcp.pop %v888
        %v890 = vmul.f32 %v885, %v889
        %v891 = vpack.c.bf16 %v890, %v890
        %892 = vrot.lane.b32.xlu0 %v823, 64
        %v893 = vpop.permute.xlu0 %892
        %v895 = vsel %vm833, %v891, 0
        %vm897 = vcmask 1043456
        %v899 = vsel %vm897, %v893, 0
        %901 = vmatprep.subr.bf16.mxu0 0
        %902 = vmatpush1.bf16.msra.mxu0 %v899
        %903 = vmatprep.subr.bf16.mxu0 0
        %904 = vmatpush1.bf16.msra.mxu0 0
        %905 = vmatprep.subr.bf16.mxu0 0
        %906 = vmatpush1.bf16.msra.mxu0 0
        %907 = vmatprep.subr.bf16.mxu0 0
        %908 = vmatpush1.bf16.msra.mxu0 0
        %909 = vmatprep.subr.bf16.mxu0 0
        %910 = vmatpush1.bf16.msra.mxu0 0
        %911 = vmatprep.subr.bf16.mxu0 0
        %912 = vmatpush1.bf16.msra.mxu0 0
        %913 = vmatprep.subr.bf16.mxu0 0
        %914 = vmatpush1.bf16.msra.mxu0 0
        %915 = vmatprep.subr.bf16.mxu0 0
        %916 = vmatpush1.bf16.msra.mxu0 0
        %917 = vmatprep.subr.bf16.mxu0 0
        %918 = vmatpush1.bf16.msra.mxu0 0
        %919 = vmatprep.subr.bf16.mxu0 0
        %920 = vmatpush1.bf16.msra.mxu0 0
        %921 = vmatprep.subr.bf16.mxu0 0
        %922 = vmatpush1.bf16.msra.mxu0 0
        %923 = vmatprep.subr.bf16.mxu0 0
        %924 = vmatpush1.bf16.msra.mxu0 0
        %925 = vmatprep.subr.bf16.mxu0 0
        %926 = vmatpush1.bf16.msra.mxu0 0
        %927 = vmatprep.subr.bf16.mxu0 0
        %928 = vmatpush1.bf16.msra.mxu0 0
        %929 = vmatprep.subr.bf16.mxu0 0
        %930 = vmatpush1.bf16.msra.mxu0 0
        %931 = vmatprep.subr.bf16.mxu0 0
        %932 = vmatpush1.bf16.msra.mxu0 0
        %933 = vmatprep.mubr.bf16.mxu0 0
        %934 = vmatmul.mubr.bf16.gmra.mrb[0].mxu0 %v895
        %v935 = vpop.f32.mrb[0].mxu0
        %v936 = vadd.f32 0.0, %v935
        %v937 = vpop.f32.mrb[0].mxu0
        %v938 = vpop.f32.mrb[0].mxu0
        %v939 = vpop.f32.mrb[0].mxu0
        %940 = vdwg.mxu0
        %v941 = vpack.c.bf16 %v936, %v936
        %vm942 = vcmask 60416
        %943 = vst.msk [vmem:[#allocation3] sm:$0xf] %vm942, %v941
        %944 = vrot.lane.b32.xlu0 %v823, 120
        %v945 = vpop.permute.xlu0 %944
        %946 = vrot.lane.b32.xlu0 %v823, 88
        %v947 = vpop.permute.xlu0 %946
        %v949 = vsel %vm833, %v945, 0
        %v952 = vsel %vm833, %v947, 0
        %954 = vmatprep.subr.bf16.mxu0 0
        %955 = vmatpush1.bf16.xpose.msra.mxu0 %v952
        %956 = vmatprep.subr.bf16.mxu0 0
        %957 = vmatpush1.bf16.xpose.msra.mxu0 0
        %958 = vmatprep.subr.bf16.mxu0 0
        %959 = vmatpush1.bf16.xpose.msra.mxu0 0
        %960 = vmatprep.subr.bf16.mxu0 0
        %961 = vmatpush1.bf16.xpose.msra.mxu0 0
        %962 = vmatprep.subr.bf16.mxu0 0
        %963 = vmatpush1.bf16.xpose.msra.mxu0 0
        %964 = vmatprep.subr.bf16.mxu0 0
        %965 = vmatpush1.bf16.xpose.msra.mxu0 0
        %966 = vmatprep.subr.bf16.mxu0 0
        %967 = vmatpush1.bf16.xpose.msra.mxu0 0
        %968 = vmatprep.subr.bf16.mxu0 0
        %969 = vmatpush1.bf16.xpose.msra.mxu0 0
        %970 = vmatprep.subr.bf16.mxu0 0
        %971 = vmatpush1.bf16.xpose.msra.mxu0 0
        %972 = vmatprep.subr.bf16.mxu0 0
        %973 = vmatpush1.bf16.xpose.msra.mxu0 0
        %974 = vmatprep.subr.bf16.mxu0 0
        %975 = vmatpush1.bf16.xpose.msra.mxu0 0
        %976 = vmatprep.subr.bf16.mxu0 0
        %977 = vmatpush1.bf16.xpose.msra.mxu0 0
        %978 = vmatprep.subr.bf16.mxu0 0
        %979 = vmatpush1.bf16.xpose.msra.mxu0 0
        %980 = vmatprep.subr.bf16.mxu0 0
        %981 = vmatpush1.bf16.xpose.msra.mxu0 0
        %982 = vmatprep.subr.bf16.mxu0 0
        %983 = vmatpush1.bf16.xpose.msra.mxu0 0
        %984 = vmatprep.subr.bf16.mxu0 0
        %985 = vmatpush1.bf16.xpose.msra.mxu0 0
        %986 = vmatprep.mubr.bf16.mxu0 0
        %987 = vmatmul.mubr.bf16.gmra.mrb[0].mxu0 %v949
        %v988 = vpop.f32.mrb[0].mxu0
        %v989 = vadd.f32 %v828, %v988
        %v990 = vpop.f32.mrb[0].mxu0
        %v991 = vpop.f32.mrb[0].mxu0
        %v992 = vpop.f32.mrb[0].mxu0
        %993 = vdwg.mxu0
        %v994 = vsel %vm833, %v989, -inf
        %995 = vmax.xlane.f32.xlu0 %v994
        %v996 = vpop.xlane.xlu0 %995
        %v997 = vsub.f32 %v989, %v996
        %v998 = vmul.f32 %v997, 1.442695
        %v999 = vpow.pop %v998
        %v1000 = vsel %vm833, %v999, 0.0
        %1001 = vadd.xlane.f32.xlu0 %v1000
        %v1002 = vpop.xlane.xlu0 %1001
        %v1003 = vrcp.pop %v1002
        %v1004 = vmul.f32 %v999, %v1003
        %v1005 = vpack.c.bf16 %v1004, %v1004
        %1006 = vrot.lane.b32.xlu0 %v823, 56
        %v1007 = vpop.permute.xlu0 %1006
        %v1009 = vsel %vm833, %v1005, 0
        %v1012 = vsel %vm897, %v1007, 0
        %1014 = vmatprep.subr.bf16.mxu0 0
        %1015 = vmatpush1.bf16.msra.mxu0 %v1012
        %1016 = vmatprep.subr.bf16.mxu0 0
        %1017 = vmatpush1.bf16.msra.mxu0 0
        %1018 = vmatprep.subr.bf16.mxu0 0
        %1019 = vmatpush1.bf16.msra.mxu0 0
        %1020 = vmatprep.subr.bf16.mxu0 0
        %1021 = vmatpush1.bf16.msra.mxu0 0
        %1022 = vmatprep.subr.bf16.mxu0 0
        %1023 = vmatpush1.bf16.msra.mxu0 0
        %1024 = vmatprep.subr.bf16.mxu0 0
        %1025 = vmatpush1.bf16.msra.mxu0 0
        %1026 = vmatprep.subr.bf16.mxu0 0
        %1027 = vmatpush1.bf16.msra.mxu0 0
        %1028 = vmatprep.subr.bf16.mxu0 0
        %1029 = vmatpush1.bf16.msra.mxu0 0
        %1030 = vmatprep.subr.bf16.mxu0 0
        %1031 = vmatpush1.bf16.msra.mxu0 0
        %1032 = vmatprep.subr.bf16.mxu0 0
        %1033 = vmatpush1.bf16.msra.mxu0 0
        %1034 = vmatprep.subr.bf16.mxu0 0
        %1035 = vmatpush1.bf16.msra.mxu0 0
        %1036 = vmatprep.subr.bf16.mxu0 0
        %1037 = vmatpush1.bf16.msra.mxu0 0
        %1038 = vmatprep.subr.bf16.mxu0 0
        %1039 = vmatpush1.bf16.msra.mxu0 0
        %1040 = vmatprep.subr.bf16.mxu0 0
        %1041 = vmatpush1.bf16.msra.mxu0 0
        %1042 = vmatprep.subr.bf16.mxu0 0
        %1043 = vmatpush1.bf16.msra.mxu0 0
        %1044 = vmatprep.subr.bf16.mxu0 0
        %1045 = vmatpush1.bf16.msra.mxu0 0
        %1046 = vmatprep.mubr.bf16.mxu0 0
        %1047 = vmatmul.mubr.bf16.gmra.mrb[0].mxu0 %v1009
        %v1048 = vpop.f32.mrb[0].mxu0
        %v1049 = vadd.f32 0.0, %v1048
        %v1050 = vpop.f32.mrb[0].mxu0
        %v1051 = vpop.f32.mrb[0].mxu0
        %v1052 = vpop.f32.mrb[0].mxu0
        %1053 = vdwg.mxu0
        %v1054 = vpack.c.bf16 %v1049, %v1049
        %v1056 = vunpack.c.l.b16 %v1054
        %v1057 = vpack.c.b16 %v1056, %v1056
        %1058 = vrot.lane.b32.xlu0 %v1057, 8
        %v1059 = vpop.permute.xlu0 %1058
        %vm1061 = vcmask 126016
        %1062 = vst.msk [vmem:[#allocation3] sm:$0xf] %vm1061, %v1059
        %1063 = vrot.lane.b32.xlu0 %v823, 112
        %v1064 = vpop.permute.xlu0 %1063
        %1065 = vrot.lane.b32.xlu0 %v823, 80
        %v1066 = vpop.permute.xlu0 %1065
        %v1068 = vsel %vm833, %v1064, 0
        %v1071 = vsel %vm833, %v1066, 0
        %1073 = vmatprep.subr.bf16.mxu0 0
        %1074 = vmatpush1.bf16.xpose.msra.mxu0 %v1071
        %1075 = vmatprep.subr.bf16.mxu0 0
        %1076 = vmatpush1.bf16.xpose.msra.mxu0 0
        %1077 = vmatprep.subr.bf16.mxu0 0
        %1078 = vmatpush1.bf16.xpose.msra.mxu0 0
        %1079 = vmatprep.subr.bf16.mxu0 0
        %1080 = vmatpush1.bf16.xpose.msra.mxu0 0
        %1081 = vmatprep.subr.bf16.mxu0 0
        %1082 = vmatpush1.bf16.xpose.msra.mxu0 0
        %1083 = vmatprep.subr.bf16.mxu0 0
        %1084 = vmatpush1.bf16.xpose.msra.mxu0 0
        %1085 = vmatprep.subr.bf16.mxu0 0
        %1086 = vmatpush1.bf16.xpose.msra.mxu0 0
        %1087 = vmatprep.subr.bf16.mxu0 0
        %1088 = vmatpush1.bf16.xpose.msra.mxu0 0
        %1089 = vmatprep.subr.bf16.mxu0 0
        %1090 = vmatpush1.bf16.xpose.msra.mxu0 0
        %1091 = vmatprep.subr.bf16.mxu0 0
        %1092 = vmatpush1.bf16.xpose.msra.mxu0 0
        %1093 = vmatprep.subr.bf16.mxu0 0
        %1094 = vmatpush1.bf16.xpose.msra.mxu0 0
        %1095 = vmatprep.subr.bf16.mxu0 0
        %1096 = vmatpush1.bf16.xpose.msra.mxu0 0
        %1097 = vmatprep.subr.bf16.mxu0 0
        %1098 = vmatpush1.bf16.xpose.msra.mxu0 0
        %1099 = vmatprep.subr.bf16.mxu0 0
        %1100 = vmatpush1.bf16.xpose.msra.mxu0 0
        %1101 = vmatprep.subr.bf16.mxu0 0
        %1102 = vmatpush1.bf16.xpose.msra.mxu0 0
        %1103 = vmatprep.subr.bf16.mxu0 0
        %1104 = vmatpush1.bf16.xpose.msra.mxu0 0
        %1105 = vmatprep.mubr.bf16.mxu0 0
        %1106 = vmatmul.mubr.bf16.gmra.mrb[0].mxu0 %v1068
        %v1107 = vpop.f32.mrb[0].mxu0
        %v1108 = vadd.f32 %v828, %v1107
        %v1109 = vpop.f32.mrb[0].mxu0
        %v1110 = vpop.f32.mrb[0].mxu0
        %v1111 = vpop.f32.mrb[0].mxu0
        %1112 = vdwg.mxu0
        %v1113 = vsel %vm833, %v1108, -inf
        %1114 = vmax.xlane.f32.xlu0 %v1113
        %v1115 = vpop.xlane.xlu0 %1114
        %v1116 = vsub.f32 %v1108, %v1115
        %v1117 = vmul.f32 %v1116, 1.442695
        %v1118 = vpow.pop %v1117
        %v1119 = vsel %vm833, %v1118, 0.0
        %1120 = vadd.xlane.f32.xlu0 %v1119
        %v1121 = vpop.xlane.xlu0 %1120
        %v1122 = vrcp.pop %v1121
        %v1123 = vmul.f32 %v1118, %v1122
        %v1124 = vpack.c.bf16 %v1123, %v1123
        %1125 = vrot.lane.b32.xlu0 %v823, 48
        %v1126 = vpop.permute.xlu0 %1125
        %v1128 = vsel %vm833, %v1124, 0
        %v1131 = vsel %vm897, %v1126, 0
        %1133 = vmatprep.subr.bf16.mxu0 0
        %1134 = vmatpush1.bf16.msra.mxu0 %v1131
        %1135 = vmatprep.subr.bf16.mxu0 0
        %1136 = vmatpush1.bf16.msra.mxu0 0
        %1137 = vmatprep.subr.bf16.mxu0 0
        %1138 = vmatpush1.bf16.msra.mxu0 0
        %1139 = vmatprep.subr.bf16.mxu0 0
        %1140 = vmatpush1.bf16.msra.mxu0 0
        %1141 = vmatprep.subr.bf16.mxu0 0
        %1142 = vmatpush1.bf16.msra.mxu0 0
        %1143 = vmatprep.subr.bf16.mxu0 0
        %1144 = vmatpush1.bf16.msra.mxu0 0
        %1145 = vmatprep.subr.bf16.mxu0 0
        %1146 = vmatpush1.bf16.msra.mxu0 0
        %1147 = vmatprep.subr.bf16.mxu0 0
        %1148 = vmatpush1.bf16.msra.mxu0 0
        %1149 = vmatprep.subr.bf16.mxu0 0
        %1150 = vmatpush1.bf16.msra.mxu0 0
        %1151 = vmatprep.subr.bf16.mxu0 0
        %1152 = vmatpush1.bf16.msra.mxu0 0
        %1153 = vmatprep.subr.bf16.mxu0 0
        %1154 = vmatpush1.bf16.msra.mxu0 0
        %1155 = vmatprep.subr.bf16.mxu0 0
        %1156 = vmatpush1.bf16.msra.mxu0 0
        %1157 = vmatprep.subr.bf16.mxu0 0
        %1158 = vmatpush1.bf16.msra.mxu0 0
        %1159 = vmatprep.subr.bf16.mxu0 0
        %1160 = vmatpush1.bf16.msra.mxu0 0
        %1161 = vmatprep.subr.bf16.mxu0 0
        %1162 = vmatpush1.bf16.msra.mxu0 0
        %1163 = vmatprep.subr.bf16.mxu0 0
        %1164 = vmatpush1.bf16.msra.mxu0 0
        %1165 = vmatprep.mubr.bf16.mxu0 0
        %1166 = vmatmul.mubr.bf16.gmra.mrb[0].mxu0 %v1128
        %v1167 = vpop.f32.mrb[0].mxu0
        %v1168 = vadd.f32 0.0, %v1167
        %v1169 = vpop.f32.mrb[0].mxu0
        %v1170 = vpop.f32.mrb[0].mxu0
        %v1171 = vpop.f32.mrb[0].mxu0
        %1172 = vdwg.mxu0
        %v1173 = vpack.c.bf16 %v1168, %v1168
        %v1175 = vunpack.c.l.b16 %v1173
        %v1176 = vpack.c.b16 %v1175, %v1175
        %1177 = vrot.lane.b32.xlu0 %v1176, 16
        %v1178 = vpop.permute.xlu0 %1177
        %vm1180 = vcmask 191616
        %1181 = vst.msk [vmem:[#allocation3] sm:$0xf] %vm1180, %v1178
        %1182 = vrot.lane.b32.xlu0 %v823, 104
        %v1183 = vpop.permute.xlu0 %1182
        %1184 = vrot.lane.b32.xlu0 %v823, 72
        %v1185 = vpop.permute.xlu0 %1184
        %v1187 = vsel %vm833, %v1183, 0
        %v1190 = vsel %vm833, %v1185, 0
        %1192 = vmatprep.subr.bf16.mxu0 0
        %1193 = vmatpush1.bf16.xpose.msra.mxu0 %v1190
        %1194 = vmatprep.subr.bf16.mxu0 0
        %1195 = vmatpush1.bf16.xpose.msra.mxu0 0
        %1196 = vmatprep.subr.bf16.mxu0 0
        %1197 = vmatpush1.bf16.xpose.msra.mxu0 0
        %1198 = vmatprep.subr.bf16.mxu0 0
        %1199 = vmatpush1.bf16.xpose.msra.mxu0 0
        %1200 = vmatprep.subr.bf16.mxu0 0
        %1201 = vmatpush1.bf16.xpose.msra.mxu0 0
        %1202 = vmatprep.subr.bf16.mxu0 0
        %1203 = vmatpush1.bf16.xpose.msra.mxu0 0
        %1204 = vmatprep.subr.bf16.mxu0 0
        %1205 = vmatpush1.bf16.xpose.msra.mxu0 0
        %1206 = vmatprep.subr.bf16.mxu0 0
        %1207 = vmatpush1.bf16.xpose.msra.mxu0 0
        %1208 = vmatprep.subr.bf16.mxu0 0
        %1209 = vmatpush1.bf16.xpose.msra.mxu0 0
        %1210 = vmatprep.subr.bf16.mxu0 0
        %1211 = vmatpush1.bf16.xpose.msra.mxu0 0
        %1212 = vmatprep.subr.bf16.mxu0 0
        %1213 = vmatpush1.bf16.xpose.msra.mxu0 0
        %1214 = vmatprep.subr.bf16.mxu0 0
        %1215 = vmatpush1.bf16.xpose.msra.mxu0 0
        %1216 = vmatprep.subr.bf16.mxu0 0
        %1217 = vmatpush1.bf16.xpose.msra.mxu0 0
        %1218 = vmatprep.subr.bf16.mxu0 0
        %1219 = vmatpush1.bf16.xpose.msra.mxu0 0
        %1220 = vmatprep.subr.bf16.mxu0 0
        %1221 = vmatpush1.bf16.xpose.msra.mxu0 0
        %1222 = vmatprep.subr.bf16.mxu0 0
        %1223 = vmatpush1.bf16.xpose.msra.mxu0 0
        %1224 = vmatprep.mubr.bf16.mxu0 0
        %1225 = vmatmul.mubr.bf16.gmra.mrb[0].mxu0 %v1187
        %v1226 = vpop.f32.mrb[0].mxu0
        %v1227 = vadd.f32 %v828, %v1226
        %v1228 = vpop.f32.mrb[0].mxu0
        %v1229 = vpop.f32.mrb[0].mxu0
        %v1230 = vpop.f32.mrb[0].mxu0
        %1231 = vdwg.mxu0
        %v1232 = vsel %vm833, %v1227, -inf
        %1233 = vmax.xlane.f32.xlu0 %v1232
        %v1234 = vpop.xlane.xlu0 %1233
        %v1235 = vsub.f32 %v1227, %v1234
        %v1236 = vmul.f32 %v1235, 1.442695
        %v1237 = vpow.pop %v1236
        %v1238 = vsel %vm833, %v1237, 0.0
        %1239 = vadd.xlane.f32.xlu0 %v1238
        %v1240 = vpop.xlane.xlu0 %1239
        %v1241 = vrcp.pop %v1240
        %v1242 = vmul.f32 %v1237, %v1241
        %v1243 = vpack.c.bf16 %v1242, %v1242
        %1244 = vrot.lane.b32.xlu0 %v823, 40
        %v1245 = vpop.permute.xlu0 %1244
        %v1247 = vsel %vm833, %v1243, 0
        %v1250 = vsel %vm897, %v1245, 0
        %1252 = vmatprep.subr.bf16.mxu0 0
        %1253 = vmatpush1.bf16.msra.mxu0 %v1250
        %1254 = vmatprep.subr.bf16.mxu0 0
        %1255 = vmatpush1.bf16.msra.mxu0 0
        %1256 = vmatprep.subr.bf16.mxu0 0
        %1257 = vmatpush1.bf16.msra.mxu0 0
        %1258 = vmatprep.subr.bf16.mxu0 0
        %1259 = vmatpush1.bf16.msra.mxu0 0
        %1260 = vmatprep.subr.bf16.mxu0 0
        %1261 = vmatpush1.bf16.msra.mxu0 0
        %1262 = vmatprep.subr.bf16.mxu0 0
        %1263 = vmatpush1.bf16.msra.mxu0 0
        %1264 = vmatprep.subr.bf16.mxu0 0
        %1265 = vmatpush1.bf16.msra.mxu0 0
        %1266 = vmatprep.subr.bf16.mxu0 0
        %1267 = vmatpush1.bf16.msra.mxu0 0
        %1268 = vmatprep.subr.bf16.mxu0 0
        %1269 = vmatpush1.bf16.msra.mxu0 0
        %1270 = vmatprep.subr.bf16.mxu0 0
        %1271 = vmatpush1.bf16.msra.mxu0 0
        %1272 = vmatprep.subr.bf16.mxu0 0
        %1273 = vmatpush1.bf16.msra.mxu0 0
        %1274 = vmatprep.subr.bf16.mxu0 0
        %1275 = vmatpush1.bf16.msra.mxu0 0
        %1276 = vmatprep.subr.bf16.mxu0 0
        %1277 = vmatpush1.bf16.msra.mxu0 0
        %1278 = vmatprep.subr.bf16.mxu0 0
        %1279 = vmatpush1.bf16.msra.mxu0 0
        %1280 = vmatprep.subr.bf16.mxu0 0
        %1281 = vmatpush1.bf16.msra.mxu0 0
        %1282 = vmatprep.subr.bf16.mxu0 0
        %1283 = vmatpush1.bf16.msra.mxu0 0
        %1284 = vmatprep.mubr.bf16.mxu0 0
        %1285 = vmatmul.mubr.bf16.gmra.mrb[0].mxu0 %v1247
        %v1286 = vpop.f32.mrb[0].mxu0
        %v1287 = vadd.f32 0.0, %v1286
        %v1288 = vpop.f32.mrb[0].mxu0
        %v1289 = vpop.f32.mrb[0].mxu0
        %v1290 = vpop.f32.mrb[0].mxu0
        %1291 = vdwg.mxu0
        %v1292 = vpack.c.bf16 %v1287, %v1287
        %v1294 = vunpack.c.l.b16 %v1292
        %v1295 = vpack.c.b16 %v1294, %v1294
        %1296 = vrot.lane.b32.xlu0 %v1295, 24
        %v1297 = vpop.permute.xlu0 %1296
        %vm1299 = vcmask 257216
        %1300 = vst.msk [vmem:[#allocation3] sm:$0xf] %vm1299, %v1297
        %v1301 = vld [vmem:[#allocation3] sm:$0xf]
        %v1302 = vld [vmem:[%s709] sm:$0xf]
        %v1303 = vld [vmem:[%s709 + $0x4] sm:$0xf]
        %v1304 = vld [vmem:[%s709 + $0x8] sm:$0xf]
        %v1305 = vld [vmem:[%s709 + $0xc] sm:$0xf]
        %v1306 = vld [vmem:[%s712] sm:$0x1]
        %v1308 = vlaneseq
        %v1309 = vshrl.u32 %v1308, 7
        %v1310 = vsub.s32 0, %v1309
        %v1311 = vrot.slane %v1306, %v1310
        %v1317 = vunpack.c.l.b16 %v1302
        %v1318 = vunpack.c.l.b16 %v1303
        %v1319 = vunpack.c.l.b16 %v1304
        %v1320 = vunpack.c.l.b16 %v1305
        %v1321 = vpack.c.b16 %v1318, %v1317
        %v1322 = vpack.c.b16 %v1320, %v1319
        %v1326 = vsel %vm779, %v1301, 0
        %1328 = vmatprep.subr.bf16.mxu0 0
        %1329 = vmatpush1.bf16.msra.mxu0 %v1321
        %1330 = vmatprep.subr.bf16.mxu0 0
        %1331 = vmatpush1.bf16.msra.mxu0 %v1322
        %1332 = vmatprep.subr.bf16.mxu0 0
        %1333 = vmatpush1.bf16.msra.mxu0 0
        %1334 = vmatprep.subr.bf16.mxu0 0
        %1335 = vmatpush1.bf16.msra.mxu0 0
        %1336 = vmatprep.subr.bf16.mxu0 0
        %1337 = vmatpush1.bf16.msra.mxu0 0
        %1338 = vmatprep.subr.bf16.mxu0 0
        %1339 = vmatpush1.bf16.msra.mxu0 0
        %1340 = vmatprep.subr.bf16.mxu0 0
        %1341 = vmatpush1.bf16.msra.mxu0 0
        %1342 = vmatprep.subr.bf16.mxu0 0
        %1343 = vmatpush1.bf16.msra.mxu0 0
        %1344 = vmatprep.subr.bf16.mxu0 0
        %1345 = vmatpush1.bf16.msra.mxu0 0
        %1346 = vmatprep.subr.bf16.mxu0 0
        %1347 = vmatpush1.bf16.msra.mxu0 0
        %1348 = vmatprep.subr.bf16.mxu0 0
        %1349 = vmatpush1.bf16.msra.mxu0 0
        %1350 = vmatprep.subr.bf16.mxu0 0
        %1351 = vmatpush1.bf16.msra.mxu0 0
        %1352 = vmatprep.subr.bf16.mxu0 0
        %1353 = vmatpush1.bf16.msra.mxu0 0
        %1354 = vmatprep.subr.bf16.mxu0 0
        %1355 = vmatpush1.bf16.msra.mxu0 0
        %1356 = vmatprep.subr.bf16.mxu0 0
        %1357 = vmatpush1.bf16.msra.mxu0 0
        %1358 = vmatprep.subr.bf16.mxu0 0
        %1359 = vmatpush1.bf16.msra.mxu0 0
        %1360 = vmatprep.mubr.bf16.mxu0 0
        %1361 = vmatmul.mubr.bf16.gmra.mrb[0].mxu0 %v1326
        %v1362 = vpop.f32.mrb[0].mxu0
        %v1363 = vadd.f32 %v1311, %v1362
        %v1364 = vpop.f32.mrb[0].mxu0
        %v1365 = vpop.f32.mrb[0].mxu0
        %v1366 = vpop.f32.mrb[0].mxu0
        %1367 = vdwg.mxu0
        %v1368 = vadd.f32 %v753, %v1363
        %v1369 = vsel %vm779, %v1368, 0.0
        %1370 = vadd.xlane.f32.xlu0 %v1369
        %v1371 = vpop.xlane.xlu0 %1370
        %v1372 = vrcp.pop 32.0
        %v1373 = vmul.f32 %v1371, %v1372
        %v1374 = vsub.f32 %v1368, %v1373
        %v1375 = vmul.f32 %v1374, %v1374
        %v1376 = vsel %vm779, %v1375, 0.0
        %1377 = vadd.xlane.f32.xlu0 %v1376
        %v1378 = vpop.xlane.xlu0 %1377
        %v1379 = vmul.f32 %v1378, %v1372
        %v1380 = vadd.f32 %v1379, 1e-05
        %v1381 = vrsqrt.pop %v1380
        %v1382 = vmul.f32 %v1374, %v1381
        %v1383 = vld [vmem:[%s715] sm:$0x1]
        %v1385 = vlaneseq
        %v1386 = vshrl.u32 %v1385, 7
        %v1387 = vsub.s32 0, %v1386
        %v1388 = vrot.slane %v1383, %v1387
        %v1390 = vmul.f32 %v1382, %v1388
        %v1391 = vld [vmem:[%s718] sm:$0x1]
        %v1393 = vlaneseq
        %v1394 = vshrl.u32 %v1393, 7
        %v1395 = vsub.s32 0, %v1394
        %v1396 = vrot.slane %v1391, %v1395
        %v1398 = vadd.f32 %v1390, %v1396
        %v1399 = vpack.c.bf16 %v1398, %v1398
        %v1400 = vld [vmem:[%s729] sm:$0xf]
        %v1401 = vld [vmem:[%s729 + $0x4] sm:$0xf]
        %v1402 = vld [vmem:[%s729 + $0x8] sm:$0xf]
        %v1403 = vld [vmem:[%s729 + $0xc] sm:$0xf]
        %v1404 = vld [vmem:[%s732] sm:$0x1]
        %v1406 = vlaneseq
        %v1407 = vshrl.u32 %v1406, 7
        %v1408 = vsub.s32 0, %v1407
        %v1409 = vrot.slane %v1404, %v1408
        %v1415 = vunpack.c.l.b16 %v1400
        %v1416 = vunpack.c.l.b16 %v1401
        %v1417 = vunpack.c.l.b16 %v1402
        %v1418 = vunpack.c.l.b16 %v1403
        %v1419 = vpack.c.b16 %v1416, %v1415
        %v1420 = vpack.c.b16 %v1418, %v1417
        %v1424 = vsel %vm779, %v1399, 0
        %1426 = vmatprep.subr.bf16.mxu0 0
        %1427 = vmatpush1.bf16.msra.mxu0 %v1419
        %1428 = vmatprep.subr.bf16.mxu0 0
        %1429 = vmatpush1.bf16.msra.mxu0 %v1420
        %1430 = vmatprep.subr.bf16.mxu0 0
        %1431 = vmatpush1.bf16.msra.mxu0 0
        %1432 = vmatprep.subr.bf16.mxu0 0
        %1433 = vmatpush1.bf16.msra.mxu0 0
        %1434 = vmatprep.subr.bf16.mxu0 0
        %1435 = vmatpush1.bf16.msra.mxu0 0
        %1436 = vmatprep.subr.bf16.mxu0 0
        %1437 = vmatpush1.bf16.msra.mxu0 0
        %1438 = vmatprep.subr.bf16.mxu0 0
        %1439 = vmatpush1.bf16.msra.mxu0 0
        %1440 = vmatprep.subr.bf16.mxu0 0
        %1441 = vmatpush1.bf16.msra.mxu0 0
        %1442 = vmatprep.subr.bf16.mxu0 0
        %1443 = vmatpush1.bf16.msra.mxu0 0
        %1444 = vmatprep.subr.bf16.mxu0 0
        %1445 = vmatpush1.bf16.msra.mxu0 0
        %1446 = vmatprep.subr.bf16.mxu0 0
        %1447 = vmatpush1.bf16.msra.mxu0 0
        %1448 = vmatprep.subr.bf16.mxu0 0
        %1449 = vmatpush1.bf16.msra.mxu0 0
        %1450 = vmatprep.subr.bf16.mxu0 0
        %1451 = vmatpush1.bf16.msra.mxu0 0
        %1452 = vmatprep.subr.bf16.mxu0 0
        %1453 = vmatpush1.bf16.msra.mxu0 0
        %1454 = vmatprep.subr.bf16.mxu0 0
        %1455 = vmatpush1.bf16.msra.mxu0 0
        %1456 = vmatprep.subr.bf16.mxu0 0
        %1457 = vmatpush1.bf16.msra.mxu0 0
        %1458 = vmatprep.mubr.bf16.mxu0 0
        %1459 = vmatmul.mubr.bf16.gmra.mrb[0].mxu0 %v1424
        %v1460 = vpop.f32.mrb[0].mxu0
        %v1461 = vadd.f32 %v1409, %v1460
        %v1462 = vpop.f32.mrb[0].mxu0
        %v1463 = vpop.f32.mrb[0].mxu0
        %v1464 = vpop.f32.mrb[0].mxu0
        %1465 = vdwg.mxu0
        %v1466 = vmax.f32 %v1461, 0.0
        %v1467 = vpack.c.bf16 %v1466, %v1466
        %v1468 = vld [vmem:[%s737] sm:$0xf]
        %v1469 = vld [vmem:[%s737 + $0x4] sm:$0xf]
        %v1470 = vld [vmem:[%s737 + $0x8] sm:$0xf]
        %v1471 = vld [vmem:[%s737 + $0xc] sm:$0xf]
        %v1472 = vld [vmem:[%s737 + $0x10] sm:$0xf]
        %v1473 = vld [vmem:[%s737 + $0x14] sm:$0xf]
        %v1474 = vld [vmem:[%s737 + $0x18] sm:$0xf]
        %v1475 = vld [vmem:[%s737 + $0x1c] sm:$0xf]
        %v1476 = vld [vmem:[%s740] sm:$0x1]
        %v1478 = vlaneseq
        %v1479 = vshrl.u32 %v1478, 7
        %v1480 = vsub.s32 0, %v1479
        %v1481 = vrot.slane %v1476, %v1480
        %v1491 = vunpack.c.l.b16 %v1468
        %v1492 = vunpack.c.l.b16 %v1469
        %v1493 = vunpack.c.l.b16 %v1470
        %v1494 = vunpack.c.l.b16 %v1471
        %v1495 = vunpack.c.l.b16 %v1472
        %v1496 = vunpack.c.l.b16 %v1473
        %v1497 = vunpack.c.l.b16 %v1474
        %v1498 = vunpack.c.l.b16 %v1475
        %v1499 = vpack.c.b16 %v1492, %v1491
        %v1500 = vpack.c.b16 %v1494, %v1493
        %v1501 = vpack.c.b16 %v1496, %v1495
        %v1502 = vpack.c.b16 %v1498, %v1497
        %vm1507 = vcmask 523264
        %v1509 = vsel %vm1507, %v1467, 0
        %1511 = vmatprep.subr.bf16.mxu0 0
        %1512 = vmatpush1.bf16.msra.mxu0 %v1499
        %1513 = vmatprep.subr.bf16.mxu0 0
        %1514 = vmatpush1.bf16.msra.mxu0 %v1500
        %1515 = vmatprep.subr.bf16.mxu0 0
        %1516 = vmatpush1.bf16.msra.mxu0 %v1501
        %1517 = vmatprep.subr.bf16.mxu0 0
        %1518 = vmatpush1.bf16.msra.mxu0 %v1502
        %1519 = vmatprep.subr.bf16.mxu0 0
        %1520 = vmatpush1.bf16.msra.mxu0 0
        %1521 = vmatprep.subr.bf16.mxu0 0
        %1522 = vmatpush1.bf16.msra.mxu0 0
        %1523 = vmatprep.subr.bf16.mxu0 0
        %1524 = vmatpush1.bf16.msra.mxu0 0
        %1525 = vmatprep.subr.bf16.mxu0 0
        %1526 = vmatpush1.bf16.msra.mxu0 0
        %1527 = vmatprep.subr.bf16.mxu0 0
        %1528 = vmatpush1.bf16.msra.mxu0 0
        %1529 = vmatprep.subr.bf16.mxu0 0
        %1530 = vmatpush1.bf16.msra.mxu0 0
        %1531 = vmatprep.subr.bf16.mxu0 0
        %1532 = vmatpush1.bf16.msra.mxu0 0
        %1533 = vmatprep.subr.bf16.mxu0 0
        %1534 = vmatpush1.bf16.msra.mxu0 0
        %1535 = vmatprep.subr.bf16.mxu0 0
        %1536 = vmatpush1.bf16.msra.mxu0 0
        %1537 = vmatprep.subr.bf16.mxu0 0
        %1538 = vmatpush1.bf16.msra.mxu0 0
        %1539 = vmatprep.subr.bf16.mxu0 0
        %1540 = vmatpush1.bf16.msra.mxu0 0
        %1541 = vmatprep.subr.bf16.mxu0 0
        %1542 = vmatpush1.bf16.msra.mxu0 0
        %1543 = vmatprep.mubr.bf16.mxu0 0
        %1544 = vmatmul.mubr.bf16.gmra.mrb[0].mxu0 %v1509
        %v1545 = vpop.f32.mrb[0].mxu0
        %v1546 = vadd.f32 %v1481, %v1545
        %v1547 = vpop.f32.mrb[0].mxu0
        %v1548 = vpop.f32.mrb[0].mxu0
        %v1549 = vpop.f32.mrb[0].mxu0
        %1550 = vdwg.mxu0
        %v1551 = vadd.f32 %v1398, %v1546
        %v1552 = vsel %vm779, %v1551, 0.0
        %1553 = vadd.xlane.f32.xlu0 %v1552
        %v1554 = vpop.xlane.xlu0 %1553
        %v1555 = vmul.f32 %v1554, %v1372
        %v1556 = vsub.f32 %v1551, %v1555
        %v1557 = vmul.f32 %v1556, %v1556
        %v1558 = vsel %vm779, %v1557, 0.0
        %1559 = vadd.xlane.f32.xlu0 %v1558
        %v1560 = vpop.xlane.xlu0 %1559
        %v1561 = vmul.f32 %v1560, %v1372
        %v1562 = vadd.f32 %v1561, 1e-05
        %v1563 = vrsqrt.pop %v1562
        %v1564 = vmul.f32 %v1556, %v1563
        %v1565 = vld [vmem:[%s721] sm:$0x1]
        %v1567 = vlaneseq
        %v1568 = vshrl.u32 %v1567, 7
        %v1569 = vsub.s32 0, %v1568
        %v1570 = vrot.slane %v1565, %v1569
        %v1572 = vmul.f32 %v1564, %v1570
        %v1573 = vld [vmem:[%s724] sm:$0x1]
        %v1575 = vlaneseq
        %v1576 = vshrl.u32 %v1575, 7
        %v1577 = vsub.s32 0, %v1576
        %v1578 = vrot.slane %v1573, %v1577
        %v1580 = vadd.f32 %v1572, %v1578
        %1581 = vst.msk [vmem:[#allocation2] sm:$0xff] %vm779, %v1580
        %p1582 = scmp.eq.s32.totalorder %s38, 1
        // Predicated region
        $region93: #{tpu_custom_call.1} parent=79 // pred_check
          %p1583 = pneg %p1582
        $region94: #{tpu_custom_call.1} parent=79 // pred_check_branch
          %1585 = sbr.rel (%p1583) target = $region96
        $region95: #{tpu_custom_call.1} parent=79 // pred_region
          %1586 = vst.msk [vmem:[%s693] sm:$0xff] %vm779, %v1580
        $region96: #{tpu_custom_call.1} parent=79 // pred_fallthru
          _
        %s1587 = sand.u32 %s438, 1
        %s1588 = scalar_lea.sflag [#allocation6], %s1587
        %s1589 = sand.u32 %s438, 1
        %s1590 = smul.addr %s1589, 8
        %s1591 = scalar_lea.vmem [#allocation9], %s1590
        // Predicated region
        $region97: #{tpu_custom_call.1} parent=79 // pred_check
          %p1592 = pneg %p448
        $region98: #{tpu_custom_call.1} parent=79 // pred_check_branch
          %1594 = sbr.rel (%p1592) target = $region100
        $region99: #{tpu_custom_call.1} parent=79 // pred_region
          %s1596 = ssub.s32 128, 128
          %1597 = vsyncadd %s1588, %s1596
          %s1598 = smul.addr %s37, 128
          %s1599 = scalar_lea.hbm %s15, %s1598
          %s1601 = sshll.u32 %s1591, 4
          %s1602 = int_to_ptr.vmem [resolvable:$true] %s1601
          %1604 = dma.vmem_to_hbm [thread:$0]  %s1602, 128, %s1599, %s1588
        $region100: #{tpu_custom_call.1} parent=79 // pred_fallthru
          _
      $region80: #{tpu_custom_call.1} parent=5 // pred_fallthru
        _
      %p1605 = scmp.le.s32.totalorder 2, %s28
      // Predicated region
      $region101: #{tpu_custom_call.1} parent=5 // pred_check
        %p1606 = pneg %p1605
      $region102: #{tpu_custom_call.1} parent=5 // pred_check_branch
        %1608 = sbr.rel (%p1606) target = $region104
      $region103: #{tpu_custom_call.1} parent=5 // pred_region
        %s1609 = ssub.s32 %s28, 2
        // Predicated region
        $region105: #{tpu_custom_call.1} parent=103 // pred_check
          %p1610 = pneg %p454
        $region106: #{tpu_custom_call.1} parent=103 // pred_check_branch
          %1612 = sbr.rel (%p1610) target = $region108
        $region107: #{tpu_custom_call.1} parent=103 // pred_region
          %s1613 = sand.u32 %s439, 1
          %s1614 = scalar_lea.sflag [#allocation6], %s1613
          %s1615 = sand.u32 %s439, 1
          %s1616 = smul.addr %s1615, 8
          %s1617 = scalar_lea.vmem [#allocation9], %s1616
          %1618 = dma.done %s1614, 128
        $region108: #{tpu_custom_call.1} parent=103 // pred_fallthru
          _
      $region104: #{tpu_custom_call.1} parent=5 // pred_fallthru
        _
    $region6: #{tpu_custom_call.1} parent=1 // loop_footer
      %s32 = sadd.s32 1, %s28
    $region7: #{tpu_custom_call.1} parent=1 // loop_footer_branch
      %27 = sbr.rel target = $region3
    $region8: #{tpu_custom_call.1} parent=1 // loop_exit
      _
    %1619 = vsyncpa [#allocation5], 1
    %s1620 = scalar_lea.sflag [#allocation5], 1
    %1621 = vsyncpa %s1620, 1
    %1622 = vsyncpa [#allocation8], 1
    %1623 = vsyncpa [#allocation6], 1
    %s1624 = scalar_lea.sflag [#allocation6], 1
    %1625 = vsyncpa %s1624, 1

</llo_original>
